<compile_context>
chip_gen: v5e
topology: v5e:2x2
jax: 0.10.0
libtpu: 0.0.40
codegen_flags: <defaults>
</compile_context>

<pallas_src>
import math

import jax
import jax.numpy as jnp
import numpy as np
from jax import lax
from jax.experimental import pallas as pl
from jax.experimental.pallas import tpu as pltpu


# ------------------------------ dtype selection -------------------------------
def _pick_mxu_dtype():
    """bf16 MXU operands on v6e/v7x (f32 accumulation); f32 on v5e/unknown."""
    try:
        kind = jax.devices()[0].device_kind.lower()
    except Exception:
        return jnp.float32
    if ("v6" in kind) or ("v7" in kind) or ("7x" in kind):
        return jnp.bfloat16
    return jnp.float32


# ----------------------------- fused network kernel ---------------------------
def _make_fused_kernel(meta, B, L, ksize, cdt):
    """Single-invocation fused TCAN forward.  Activations live as (C, B*L)
    lane-dense slabs; per-batch attention / causal semantics are enforced with
    a same-batch mask built from iotas (trace-time constants)."""
    BL = B * L
    NEG = -1e30          # large finite negative; exp underflows to exactly 0
    f32 = jnp.float32

    def kernel(x_ref, w_ref, o_ref):
        # ---- static (trace-time) index helpers -------------------------------
        row = lax.broadcasted_iota(jnp.int32, (BL, BL), 0)   # query index j
        col = lax.broadcasted_iota(jnp.int32, (BL, BL), 1)   # key index i
        rbatch = jnp.zeros((BL, BL), jnp.int32)
        cbatch = jnp.zeros((BL, BL), jnp.int32)
        clocal = col
        for b in range(1, B):                                # B is tiny & static
            rbatch = jnp.where(row >= b * L, b, rbatch)
            cbatch = jnp.where(col >= b * L, b, cbatch)
            clocal = jnp.where(col >= b * L, col - b * L, clocal)
        same_batch = rbatch == cbatch
        keep = same_batch & (col <= row)                     # causal, per batch
        same_batch_f = jnp.where(same_batch, 1.0, 0.0)       # f32 0/1 matrix
        ones_row = jnp.ones((1, BL), f32)

        shift_cache = {}

        def shift_mat(s):
            # S[t, p] = 1 iff p == t + s and (p mod L) >= s : causal left-pad
            # shift of the lane axis that never crosses a batch boundary.
            # Applied on the MXU (idle at these sizes) -> no scratch, no
            # masked stores, no lane relayouts.
            if s not in shift_cache:
                shift_cache[s] = jnp.where(((col - row) == s) & (clocal >= s),
                                           1.0, 0.0).astype(cdt)
            return shift_cache[s]

        def mxu(a, b):
            return jnp.dot(a.astype(cdt), b.astype(cdt),
                           preferred_element_type=f32)

        # ---- AttentionBlock (1/sqrt(C) pre-folded into Wq/bq at pack time) ----
        def attention(xb, m):
            c, r = m["c_in"], m["qkv_off"]
            w = w_ref[r:r + 3 * c, 0:c]                      # packed [Wq;Wk;Wv]
            bias = w_ref[r:r + 3 * c, c:c + 1]
            qkv = mxu(w, xb) + bias                          # (3c, BL)
            q, k, v = qkv[0:c], qkv[c:2 * c], qkv[2 * c:3 * c]
            # scores[j, i] = <q[:, j], k[:, i]>   (contraction on channels)
            scores = lax.dot_general(q.astype(cdt), k.astype(cdt),
                                     (((0,), (0,)), ((), ())),
                                     preferred_element_type=f32)
            logits = jnp.where(keep, scores, NEG)
            # torch softmax over dim=1 of (B, L, L) == the query axis (axis 0).
            mx = jnp.max(logits, axis=0, keepdims=True)
            e = jnp.exp(logits - mx)
            wgt = e * pl.reciprocal(jnp.sum(e, axis=0, keepdims=True),
                                    approx=True)
            # out[c, j] = sum_i wgt[j, i] * v[c, i]
            out = lax.dot_general(v.astype(cdt), wgt.astype(cdt),
                                  (((1,), (1,)), ((), ())),
                                  preferred_element_type=f32)
            # weight_x = per-batch softmax_j( sum_i wgt[j, i] ) -- exact f32 math
            # (lane-major row-sum and per-batch denominator via MXU matvecs; a
            # global max shift is valid since softmax is shift-invariant).
            srow = lax.dot_general(ones_row, wgt, (((1,), (1,)), ((), ())),
                                   preferred_element_type=f32)      # (1, BL)
            mx2 = jnp.max(srow, axis=1, keepdims=True)
            e2 = jnp.exp(srow - mx2)
            den = lax.dot_general(e2, same_batch_f, (((1,), (0,)), ((), ())),
                                  preferred_element_type=f32)
            wx = e2 / den                                             # (1, BL)
            return out, wx

        # ---- causal dilated conv + Chomp1d + bias + ReLU (all in registers) ---
        def conv_relu(h, off, c_in, c_out, dil):
            acc = None
            for j in range(ksize):
                s = (ksize - 1 - j) * dil
                wj = w_ref[off:off + c_out, j * c_in:(j + 1) * c_in]
                hs = h if s == 0 else jnp.dot(h.astype(cdt), shift_mat(s),
                                              preferred_element_type=f32)
                t = mxu(wj, hs)
                acc = t if acc is None else acc + t
            bias = w_ref[off:off + c_out, ksize * c_in:ksize * c_in + 1]
            return jnp.maximum(acc + bias, 0.0)

        # ---- TemporalBlock stack ----------------------------------------------
        h = x_ref[...]                                       # (C0, B*L)
        for m in meta:
            blk_in = h
            g, wx = attention(blk_in, m)
            ci = m["c_in"]
            for off in m["conv_offs"]:
                g = conv_relu(g, off, ci, m["c_out"], m["dil"])
                ci = m["c_out"]
            if m["down_off"] is not None:                    # 1x1 downsample
                off, cin, cout = m["down_off"], m["c_in"], m["c_out"]
                wd = w_ref[off:off + cout, 0:cin]
                bd = w_ref[off:off + cout, cin:cin + 1]
                res = mxu(wd, blk_in) + bd
                en = mxu(wd, blk_in * wx) + bd
            else:
                res = blk_in
                en = blk_in * wx
            h = jnp.maximum(g + res + en, 0.0)               # relu(out+res+en_res)
        o_ref[...] = h

    return kernel


# ------------------------- weight layout & host packing ------------------------
def _align8(n):
    return ((n + 7) // 8) * 8


def _build_layout(params, kernel_size):
    """Static row offsets (8-row aligned) of every weight inside the packed buf."""
    del kernel_size
    meta, off = [], 0
    for i, p in enumerate(params):
        c_in = p["Wq"].shape[0]
        c_out = p["convs"][0][0].shape[0]
        m = {"c_in": c_in, "c_out": c_out, "dil": 2 ** i, "qkv_off": off}
        off += _align8(3 * c_in)
        conv_offs = []
        for (W, _) in p["convs"]:
            conv_offs.append(off)
            off += _align8(W.shape[0])
        m["conv_offs"] = tuple(conv_offs)
        if c_in != c_out:
            m["down_off"] = off
            off += _align8(c_out)
        else:
            m["down_off"] = None
        meta.append(m)
    return meta, _align8(off)


def _pack_weights(params, meta, ksize, total_rows, width=128):
    """One contiguous f32 buffer: each weight at an 8-row-aligned offset, its
    bias stored as the column right after the weight block, conv weights
    flattened tap-major, and the 1/sqrt(C) attention scale folded into Wq/bq."""
    buf = np.zeros((total_rows, width), np.float32)
    for p, m in zip(params, meta):
        c_in, c_out = m["c_in"], m["c_out"]
        assert ksize * max(c_in, c_out) + 1 <= width
        inv = 1.0 / math.sqrt(c_in)
        Wq = np.asarray(p["Wq"], np.float32) * inv
        bq = np.asarray(p["bq"], np.float32) * inv
        Wqkv = np.concatenate([Wq, np.asarray(p["Wk"]), np.asarray(p["Wv"])], 0)
        bqkv = np.concatenate([bq, np.asarray(p["bk"]), np.asarray(p["bv"])], 0)
        r = m["qkv_off"]
        buf[r:r + 3 * c_in, 0:c_in] = Wqkv
        buf[r:r + 3 * c_in, c_in] = bqkv
        ci = c_in
        for off, (W, b) in zip(m["conv_offs"], p["convs"]):
            Wf = np.transpose(np.asarray(W, np.float32),
                              (0, 2, 1)).reshape(c_out, ksize * ci)
            buf[off:off + c_out, 0:ksize * ci] = Wf
            buf[off:off + c_out, ksize * ci] = np.asarray(b, np.float32)
            ci = c_out
        if m["down_off"] is not None:
            Wd, bd = p["down"]
            off = m["down_off"]
            buf[off:off + c_out, 0:c_in] = np.asarray(Wd, np.float32)
            buf[off:off + c_out, c_in] = np.asarray(bd, np.float32)
    return jnp.asarray(buf)


def _cost_estimate(meta, B, L, ksize, x_bytes, w_bytes, o_bytes):
    BL = B * L
    flops, trans = 0, 0
    for m in meta:
        ci, co = m["c_in"], m["c_out"]
        flops += 2 * (3 * ci) * ci * BL                 # packed QKV GEMM
        flops += 2 * BL * BL * ci                       # attention scores
        flops += 2 * ci * BL * BL                       # attention output
        flops += 2 * 2 * BL * BL                        # weight_x matvecs
        cc = ci
        for _ in m["conv_offs"]:
            flops += 2 * co * cc * BL * ksize           # conv taps
            flops += 2 * cc * BL * BL * (ksize - 1)     # MXU register shifts
            cc = co
        if m["down_off"] is not None:
            flops += 2 * 2 * co * ci * BL               # res + en_res downsample
        trans += BL * BL + BL                           # exp()s
    return pl.CostEstimate(flops=flops, transcendentals=trans,
                           bytes_accessed=x_bytes + w_bytes + o_bytes)


# ------------------------------- wrapper ---------------------------------------
def temporal_conv_net_forward(x, wbuf, meta, kernel_size, mxu_dtype=None):
    B, C0, L = x.shape
    if mxu_dtype is None:
        mxu_dtype = _pick_mxu_dtype()
    c_last = meta[-1]["c_out"]
    BL = B * L
    # Layout plumbing only: present the activations / output as lane-dense slabs.
    x2d = jnp.transpose(x, (1, 0, 2)).reshape(C0, BL)
    kernel = _make_fused_kernel(meta, B, L, kernel_size, mxu_dtype)
    out2d = pl.pallas_call(
        kernel,
        out_shape=jax.ShapeDtypeStruct((c_last, BL), jnp.float32),
        in_specs=[pl.BlockSpec(memory_space=pltpu.MemorySpace.VMEM),
                  pl.BlockSpec(memory_space=pltpu.MemorySpace.VMEM)],
        out_specs=pl.BlockSpec(memory_space=pltpu.MemorySpace.VMEM),
        cost_estimate=_cost_estimate(
            meta, B, L, kernel_size,
            x.size * x.dtype.itemsize,
            wbuf.size * wbuf.dtype.itemsize,
            B * c_last * L * 4),
    )(x2d, wbuf)
    return jnp.transpose(out2d.reshape(c_last, B, L), (1, 0, 2))


# ------------------------------- parameters ------------------------------------
def init_params(key, emb_size, num_channels, kernel_size, num_sub_blocks):
    params = []
    in_ch = emb_size
    for out_ch in num_channels:
        key, *ks = jax.random.split(key, 7)
        p = {
            "Wq": 0.1 * jax.random.normal(ks[0], (in_ch, in_ch), jnp.float32),
            "bq": 0.1 * jax.random.normal(ks[1], (in_ch,), jnp.float32),
            "Wk": 0.1 * jax.random.normal(ks[2], (in_ch, in_ch), jnp.float32),
            "bk": 0.1 * jax.random.normal(ks[3], (in_ch,), jnp.float32),
            "Wv": 0.1 * jax.random.normal(ks[4], (in_ch, in_ch), jnp.float32),
            "bv": 0.1 * jax.random.normal(ks[5], (in_ch,), jnp.float32),
        }
        convs = []
        ci = in_ch
        for _ in range(num_sub_blocks):
            key, kw, kb = jax.random.split(key, 3)
            convs.append((0.01 * jax.random.normal(kw, (out_ch, ci, kernel_size),
                                                   jnp.float32),
                          0.01 * jax.random.normal(kb, (out_ch,), jnp.float32)))
            ci = out_ch
        p["convs"] = convs
        if in_ch != out_ch:                                    # downsample 1x1 conv
            key, kw, kb = jax.random.split(key, 3)
            p["down"] = (0.01 * jax.random.normal(kw, (out_ch, in_ch), jnp.float32),
                         0.01 * jax.random.normal(kb, (out_ch,), jnp.float32))
        params.append(p)
        in_ch = out_ch
    return params


# ------------------------- pure-JAX reference (check) ---------------------------
def _ref_attention(x, p):
    xt = jnp.transpose(x, (0, 2, 1))
    q = xt @ p["Wq"].T + p["bq"]
    k = xt @ p["Wk"].T + p["bk"]
    v = xt @ p["Wv"].T + p["bv"]
    scores = jnp.einsum("bjc,bic->bji", q, k)
    L = x.shape[2]
    row = jnp.arange(L)[:, None]
    col = jnp.arange(L)[None, :]
    logits = jnp.where(col > row, -jnp.inf, scores) / math.sqrt(x.shape[1])
    w = jax.nn.softmax(logits, axis=1)
    out_attn = jnp.einsum("bji,bic->bcj", w, v)
    wx = jax.nn.softmax(jnp.sum(w, axis=2), axis=1)
    return out_attn, wx


def _ref_conv(x, W, b, dilation):
    C_out, _, k = W.shape
    P = (k - 1) * dilation
    xpad = jnp.pad(x, ((0, 0), (0, 0), (P, 0)))
    L = x.shape[2]
    acc = jnp.zeros((x.shape[0], C_out, L), jnp.float32) + b[None, :, None]
    for j in range(k):
        acc = acc + jnp.einsum("oi,bil->bol", W[:, :, j],
                               xpad[:, :, j * dilation:j * dilation + L])
    return jnp.maximum(acc, 0.0)


def _ref_block(x, p, dilation):
    out_attn, wx = _ref_attention(x, p)
    h = out_attn
    for (W, b) in p["convs"]:
        h = _ref_conv(h, W, b, dilation)
    en = wx[:, None, :] * x
    if "down" in p:
        Wd, bd = p["down"]
        res = jnp.einsum("oi,bil->bol", Wd, x) + bd[None, :, None]
        en = jnp.einsum("oi,bil->bol", Wd, en) + bd[None, :, None]
    else:
        res = x
    return jnp.maximum(h + res + en, 0.0)


# ------------------------------------ main --------------------------------------
if __name__ == "__main__":
    B, emb_size, L = 2, 8, 16
    num_channels = [16, 16]
    kernel_size = 3
    num_sub_blocks = 2

    key = jax.random.PRNGKey(0)
    kx, kp = jax.random.split(key)
    x = jax.random.normal(kx, (B, emb_size, L), jnp.float32)
    params = init_params(kp, emb_size, num_channels, kernel_size, num_sub_blocks)

    meta, total_rows = _build_layout(params, kernel_size)
    wbuf = _pack_weights(params, meta, kernel_size, total_rows)

    mxu_dtype = _pick_mxu_dtype()
    out = temporal_conv_net_forward(x, wbuf, meta, kernel_size, mxu_dtype)
    out = jax.block_until_ready(out)

    ref = x
    for i, p in enumerate(params):
        ref = _ref_block(ref, p, 2 ** i)

    assert out.shape == (B, num_channels[-1], L)
    max_err = float(jnp.max(jnp.abs(out - ref)))
    # f32 path: tolerance limited by the EUP approximate reciprocal in the big
    # attention softmax.  bf16 MXU path (v6e/v7x): bf16 operand rounding.
    tol = 2e-3 if mxu_dtype == jnp.float32 else 3e-2
    assert jnp.allclose(out, ref, atol=tol, rtol=tol), max_err
    print("KERNEL_OK")
</pallas_src>

<mosaic_0001>
module attributes {stable_mosaic.version = 11 : i64} {
  func.func @kernel(%arg0: memref<8x32xf32, #tpu.memory_space<vmem>>, %arg1: memref<152x128xf32, #tpu.memory_space<vmem>>, %arg2: memref<16x32xf32, #tpu.memory_space<vmem>>) attributes {dimension_semantics = [], scalar_prefetch = 0 : i64, scratch_operands = 0 : i64, tpu.core_type = #tpu.core_type<tc>} {
    %0 = tpu.iota {dimensions = array<i32: 0>} : vector<32x32xi32>
    %1 = tpu.iota {dimensions = array<i32: 1>} : vector<32x32xi32>
    %c0_i32 = arith.constant 0 : i32
    %2 = vector.broadcast %c0_i32 : i32 to vector<32x32xi32>
    %c0_i32_0 = arith.constant 0 : i32
    %3 = vector.broadcast %c0_i32_0 : i32 to vector<32x32xi32>
    %c16_i32 = arith.constant 16 : i32
    %4 = vector.broadcast %c16_i32 : i32 to vector<32x32xi32>
    %5 = arith.cmpi sge, %0, %4 : vector<32x32xi32>
    %c1_i32 = arith.constant 1 : i32
    %6 = vector.broadcast %c1_i32 : i32 to vector<32x32xi32>
    %7 = arith.select %5, %6, %2 : vector<32x32xi1>, vector<32x32xi32>
    %c16_i32_1 = arith.constant 16 : i32
    %8 = vector.broadcast %c16_i32_1 : i32 to vector<32x32xi32>
    %9 = arith.cmpi sge, %1, %8 : vector<32x32xi32>
    %c1_i32_2 = arith.constant 1 : i32
    %10 = vector.broadcast %c1_i32_2 : i32 to vector<32x32xi32>
    %11 = arith.select %9, %10, %3 : vector<32x32xi1>, vector<32x32xi32>
    %c16_i32_3 = arith.constant 16 : i32
    %12 = vector.broadcast %c16_i32_3 : i32 to vector<32x32xi32>
    %13 = arith.cmpi sge, %1, %12 : vector<32x32xi32>
    %c16_i32_4 = arith.constant 16 : i32
    %14 = vector.broadcast %c16_i32_4 : i32 to vector<32x32xi32>
    %15 = arith.subi %1, %14 : vector<32x32xi32>
    %16 = arith.select %13, %15, %1 : vector<32x32xi1>, vector<32x32xi32>
    %17 = arith.cmpi eq, %7, %11 : vector<32x32xi32>
    %18 = arith.cmpi sle, %1, %0 : vector<32x32xi32>
    %19 = arith.andi %17, %18 : vector<32x32xi1>
    %cst = arith.constant 1.000000e+00 : f32
    %cst_5 = arith.constant 0.000000e+00 : f32
    %20 = vector.broadcast %cst : f32 to vector<32x32xf32>
    %21 = vector.broadcast %cst_5 : f32 to vector<32x32xf32>
    %22 = arith.select %17, %20, %21 : vector<32x32xi1>, vector<32x32xf32>
    %cst_6 = arith.constant 1.000000e+00 : f32
    %23 = vector.broadcast %cst_6 : f32 to vector<1x32xf32>
    %c0 = arith.constant 0 : index
    %c0_7 = arith.constant 0 : index
    %24 = vector.load %arg0[%c0, %c0_7] : memref<8x32xf32, #tpu.memory_space<vmem>>, vector<8x32xf32>
    %c0_8 = arith.constant 0 : index
    %c0_9 = arith.constant 0 : index
    %25 = vector.load %arg1[%c0_8, %c0_9] : memref<152x128xf32, #tpu.memory_space<vmem>>, vector<24x8xf32>
    %c0_10 = arith.constant 0 : index
    %c8 = arith.constant 8 : index
    %26 = vector.load %arg1[%c0_10, %c8] : memref<152x128xf32, #tpu.memory_space<vmem>>, vector<24x1xf32>
    %cst_11 = arith.constant dense<0.000000e+00> : vector<24x32xf32>
    %27 = tpu.matmul %25, %24, %cst_11 {dimension_numbers = #tpu.dot_dimension_numbers<[1], [0], [0], [1], [0, 0, 1, 1], [], []>} : vector<24x8xf32>, vector<8x32xf32>, vector<24x32xf32> -> vector<24x32xf32>
    %28 = vector.broadcast %26 : vector<24x1xf32> to vector<24x32xf32>
    %29 = arith.addf %27, %28 : vector<24x32xf32>
    %30 = vector.extract_strided_slice %29 {offsets = [0, 0], sizes = [8, 32], strides = [1, 1]} : vector<24x32xf32> to vector<8x32xf32>
    %31 = vector.extract_strided_slice %29 {offsets = [8, 0], sizes = [8, 32], strides = [1, 1]} : vector<24x32xf32> to vector<8x32xf32>
    %32 = vector.extract_strided_slice %29 {offsets = [16, 0], sizes = [8, 32], strides = [1, 1]} : vector<24x32xf32> to vector<8x32xf32>
    %cst_12 = arith.constant dense<0.000000e+00> : vector<32x32xf32>
    %33 = tpu.matmul %30, %31, %cst_12 {dimension_numbers = #tpu.dot_dimension_numbers<[0], [0], [1], [1], [0, 1, 1, 1], [], []>} : vector<8x32xf32>, vector<8x32xf32>, vector<32x32xf32> -> vector<32x32xf32>
    %cst_13 = arith.constant -1.000000e+30 : f32
    %34 = vector.broadcast %cst_13 : f32 to vector<32x32xf32>
    %35 = arith.select %19, %33, %34 : vector<32x32xi1>, vector<32x32xf32>
    %cst_14 = arith.constant dense<0xFF800000> : vector<32xf32>
    %36 = vector.multi_reduction <maximumf>, %35, %cst_14 [0] : vector<32x32xf32> to vector<32xf32>
    %37 = vector.shape_cast %36 : vector<32xf32> to vector<1x32xf32>
    %38 = vector.broadcast %37 : vector<1x32xf32> to vector<32x32xf32>
    %39 = arith.subf %35, %38 : vector<32x32xf32>
    %40 = math.exp %39 : vector<32x32xf32>
    %cst_15 = arith.constant dense<0.000000e+00> : vector<32xf32>
    %41 = vector.multi_reduction <add>, %40, %cst_15 [0] : vector<32x32xf32> to vector<32xf32>
    %42 = vector.shape_cast %41 : vector<32xf32> to vector<1x32xf32>
    %43 = tpu.reciprocal %42 {approx = true} : vector<1x32xf32> -> vector<1x32xf32>
    %44 = vector.broadcast %43 : vector<1x32xf32> to vector<32x32xf32>
    %45 = arith.mulf %40, %44 : vector<32x32xf32>
    %cst_16 = arith.constant dense<0.000000e+00> : vector<8x32xf32>
    %46 = tpu.matmul %32, %45, %cst_16 {dimension_numbers = #tpu.dot_dimension_numbers<[1], [1], [0], [0], [0, 0, 1, 0], [], []>} : vector<8x32xf32>, vector<32x32xf32>, vector<8x32xf32> -> vector<8x32xf32>
    %cst_17 = arith.constant dense<0.000000e+00> : vector<1x32xf32>
    %47 = tpu.matmul %23, %45, %cst_17 {dimension_numbers = #tpu.dot_dimension_numbers<[1], [1], [0], [0], [0, 0, 1, 0], [], []>} : vector<1x32xf32>, vector<32x32xf32>, vector<1x32xf32> -> vector<1x32xf32>
    %cst_18 = arith.constant dense<0xFF800000> : vector<1xf32>
    %48 = vector.multi_reduction <maximumf>, %47, %cst_18 [1] : vector<1x32xf32> to vector<1xf32>
    %49 = vector.shape_cast %48 : vector<1xf32> to vector<1x1xf32>
    %50 = vector.broadcast %49 : vector<1x1xf32> to vector<1x32xf32>
    %51 = arith.subf %47, %50 : vector<1x32xf32>
    %52 = math.exp %51 : vector<1x32xf32>
    %cst_19 = arith.constant dense<0.000000e+00> : vector<1x32xf32>
    %53 = tpu.matmul %52, %22, %cst_19 {dimension_numbers = #tpu.dot_dimension_numbers<[1], [0], [0], [1], [0, 0, 1, 1], [], []>} : vector<1x32xf32>, vector<32x32xf32>, vector<1x32xf32> -> vector<1x32xf32>
    %54 = arith.divf %52, %53 : vector<1x32xf32>
    %c24 = arith.constant 24 : index
    %c0_20 = arith.constant 0 : index
    %55 = vector.load %arg1[%c24, %c0_20] : memref<152x128xf32, #tpu.memory_space<vmem>>, vector<16x8xf32>
    %56 = arith.subi %1, %0 : vector<32x32xi32>
    %c2_i32 = arith.constant 2 : i32
    %57 = vector.broadcast %c2_i32 : i32 to vector<32x32xi32>
    %58 = arith.cmpi eq, %56, %57 : vector<32x32xi32>
    %c2_i32_21 = arith.constant 2 : i32
    %59 = vector.broadcast %c2_i32_21 : i32 to vector<32x32xi32>
    %60 = arith.cmpi sge, %16, %59 : vector<32x32xi32>
    %61 = arith.andi %58, %60 : vector<32x32xi1>
    %cst_22 = arith.constant 1.000000e+00 : f32
    %cst_23 = arith.constant 0.000000e+00 : f32
    %62 = vector.broadcast %cst_22 : f32 to vector<32x32xf32>
    %63 = vector.broadcast %cst_23 : f32 to vector<32x32xf32>
    %64 = arith.select %61, %62, %63 : vector<32x32xi1>, vector<32x32xf32>
    %cst_24 = arith.constant dense<0.000000e+00> : vector<8x32xf32>
    %65 = tpu.matmul %46, %64, %cst_24 {dimension_numbers = #tpu.dot_dimension_numbers<[1], [0], [0], [1], [0, 0, 1, 1], [], []>} : vector<8x32xf32>, vector<32x32xf32>, vector<8x32xf32> -> vector<8x32xf32>
    %cst_25 = arith.constant dense<0.000000e+00> : vector<16x32xf32>
    %66 = tpu.matmul %55, %65, %cst_25 {dimension_numbers = #tpu.dot_dimension_numbers<[1], [0], [0], [1], [0, 0, 1, 1], [], []>} : vector<16x8xf32>, vector<8x32xf32>, vector<16x32xf32> -> vector<16x32xf32>
    %c24_26 = arith.constant 24 : index
    %c8_27 = arith.constant 8 : index
    %67 = vector.load %arg1[%c24_26, %c8_27] : memref<152x128xf32, #tpu.memory_space<vmem>>, vector<16x8xf32>
    %68 = arith.subi %1, %0 : vector<32x32xi32>
    %c1_i32_28 = arith.constant 1 : i32
    %69 = vector.broadcast %c1_i32_28 : i32 to vector<32x32xi32>
    %70 = arith.cmpi eq, %68, %69 : vector<32x32xi32>
    %c1_i32_29 = arith.constant 1 : i32
    %71 = vector.broadcast %c1_i32_29 : i32 to vector<32x32xi32>
    %72 = arith.cmpi sge, %16, %71 : vector<32x32xi32>
    %73 = arith.andi %70, %72 : vector<32x32xi1>
    %cst_30 = arith.constant 1.000000e+00 : f32
    %cst_31 = arith.constant 0.000000e+00 : f32
    %74 = vector.broadcast %cst_30 : f32 to vector<32x32xf32>
    %75 = vector.broadcast %cst_31 : f32 to vector<32x32xf32>
    %76 = arith.select %73, %74, %75 : vector<32x32xi1>, vector<32x32xf32>
    %cst_32 = arith.constant dense<0.000000e+00> : vector<8x32xf32>
    %77 = tpu.matmul %46, %76, %cst_32 {dimension_numbers = #tpu.dot_dimension_numbers<[1], [0], [0], [1], [0, 0, 1, 1], [], []>} : vector<8x32xf32>, vector<32x32xf32>, vector<8x32xf32> -> vector<8x32xf32>
    %cst_33 = arith.constant dense<0.000000e+00> : vector<16x32xf32>
    %78 = tpu.matmul %67, %77, %cst_33 {dimension_numbers = #tpu.dot_dimension_numbers<[1], [0], [0], [1], [0, 0, 1, 1], [], []>} : vector<16x8xf32>, vector<8x32xf32>, vector<16x32xf32> -> vector<16x32xf32>
    %79 = arith.addf %66, %78 : vector<16x32xf32>
    %c24_34 = arith.constant 24 : index
    %c16 = arith.constant 16 : index
    %80 = vector.load %arg1[%c24_34, %c16] : memref<152x128xf32, #tpu.memory_space<vmem>>, vector<16x8xf32>
    %cst_35 = arith.constant dense<0.000000e+00> : vector<16x32xf32>
    %81 = tpu.matmul %80, %46, %cst_35 {dimension_numbers = #tpu.dot_dimension_numbers<[1], [0], [0], [1], [0, 0, 1, 1], [], []>} : vector<16x8xf32>, vector<8x32xf32>, vector<16x32xf32> -> vector<16x32xf32>
    %82 = arith.addf %79, %81 : vector<16x32xf32>
    %c24_36 = arith.constant 24 : index
    %c24_37 = arith.constant 24 : index
    %83 = vector.load %arg1[%c24_36, %c24_37] : memref<152x128xf32, #tpu.memory_space<vmem>>, vector<16x1xf32>
    %84 = vector.broadcast %83 : vector<16x1xf32> to vector<16x32xf32>
    %85 = arith.addf %82, %84 : vector<16x32xf32>
    %cst_38 = arith.constant 0.000000e+00 : f32
    %86 = vector.broadcast %cst_38 : f32 to vector<16x32xf32>
    %87 = arith.maximumf %85, %86 : vector<16x32xf32>
    %c40 = arith.constant 40 : index
    %c0_39 = arith.constant 0 : index
    %88 = vector.load %arg1[%c40, %c0_39] : memref<152x128xf32, #tpu.memory_space<vmem>>, vector<16x16xf32>
    %cst_40 = arith.constant dense<0.000000e+00> : vector<16x32xf32>
    %89 = tpu.matmul %87, %64, %cst_40 {dimension_numbers = #tpu.dot_dimension_numbers<[1], [0], [0], [1], [0, 0, 1, 1], [], []>} : vector<16x32xf32>, vector<32x32xf32>, vector<16x32xf32> -> vector<16x32xf32>
    %cst_41 = arith.constant dense<0.000000e+00> : vector<16x32xf32>
    %90 = tpu.matmul %88, %89, %cst_41 {dimension_numbers = #tpu.dot_dimension_numbers<[1], [0], [0], [1], [0, 0, 1, 1], [], []>} : vector<16x16xf32>, vector<16x32xf32>, vector<16x32xf32> -> vector<16x32xf32>
    %c40_42 = arith.constant 40 : index
    %c16_43 = arith.constant 16 : index
    %91 = vector.load %arg1[%c40_42, %c16_43] : memref<152x128xf32, #tpu.memory_space<vmem>>, vector<16x16xf32>
    %cst_44 = arith.constant dense<0.000000e+00> : vector<16x32xf32>
    %92 = tpu.matmul %87, %76, %cst_44 {dimension_numbers = #tpu.dot_dimension_numbers<[1], [0], [0], [1], [0, 0, 1, 1], [], []>} : vector<16x32xf32>, vector<32x32xf32>, vector<16x32xf32> -> vector<16x32xf32>
    %cst_45 = arith.constant dense<0.000000e+00> : vector<16x32xf32>
    %93 = tpu.matmul %91, %92, %cst_45 {dimension_numbers = #tpu.dot_dimension_numbers<[1], [0], [0], [1], [0, 0, 1, 1], [], []>} : vector<16x16xf32>, vector<16x32xf32>, vector<16x32xf32> -> vector<16x32xf32>
    %94 = arith.addf %90, %93 : vector<16x32xf32>
    %c40_46 = arith.constant 40 : index
    %c32 = arith.constant 32 : index
    %95 = vector.load %arg1[%c40_46, %c32] : memref<152x128xf32, #tpu.memory_space<vmem>>, vector<16x16xf32>
    %cst_47 = arith.constant dense<0.000000e+00> : vector<16x32xf32>
    %96 = tpu.matmul %95, %87, %cst_47 {dimension_numbers = #tpu.dot_dimension_numbers<[1], [0], [0], [1], [0, 0, 1, 1], [], []>} : vector<16x16xf32>, vector<16x32xf32>, vector<16x32xf32> -> vector<16x32xf32>
    %97 = arith.addf %94, %96 : vector<16x32xf32>
    %c40_48 = arith.constant 40 : index
    %c48 = arith.constant 48 : index
    %98 = vector.load %arg1[%c40_48, %c48] : memref<152x128xf32, #tpu.memory_space<vmem>>, vector<16x1xf32>
    %99 = vector.broadcast %98 : vector<16x1xf32> to vector<16x32xf32>
    %100 = arith.addf %97, %99 : vector<16x32xf32>
    %cst_49 = arith.constant 0.000000e+00 : f32
    %101 = vector.broadcast %cst_49 : f32 to vector<16x32xf32>
    %102 = arith.maximumf %100, %101 : vector<16x32xf32>
    %c56 = arith.constant 56 : index
    %c0_50 = arith.constant 0 : index
    %103 = vector.load %arg1[%c56, %c0_50] : memref<152x128xf32, #tpu.memory_space<vmem>>, vector<16x8xf32>
    %c56_51 = arith.constant 56 : index
    %c8_52 = arith.constant 8 : index
    %104 = vector.load %arg1[%c56_51, %c8_52] : memref<152x128xf32, #tpu.memory_space<vmem>>, vector<16x1xf32>
    %cst_53 = arith.constant dense<0.000000e+00> : vector<16x32xf32>
    %105 = tpu.matmul %103, %24, %cst_53 {dimension_numbers = #tpu.dot_dimension_numbers<[1], [0], [0], [1], [0, 0, 1, 1], [], []>} : vector<16x8xf32>, vector<8x32xf32>, vector<16x32xf32> -> vector<16x32xf32>
    %106 = vector.broadcast %104 : vector<16x1xf32> to vector<16x32xf32>
    %107 = arith.addf %105, %106 : vector<16x32xf32>
    %108 = vector.broadcast %54 : vector<1x32xf32> to vector<8x32xf32>
    %109 = arith.mulf %24, %108 : vector<8x32xf32>
    %cst_54 = arith.constant dense<0.000000e+00> : vector<16x32xf32>
    %110 = tpu.matmul %103, %109, %cst_54 {dimension_numbers = #tpu.dot_dimension_numbers<[1], [0], [0], [1], [0, 0, 1, 1], [], []>} : vector<16x8xf32>, vector<8x32xf32>, vector<16x32xf32> -> vector<16x32xf32>
    %111 = vector.broadcast %104 : vector<16x1xf32> to vector<16x32xf32>
    %112 = arith.addf %110, %111 : vector<16x32xf32>
    %113 = arith.addf %102, %107 : vector<16x32xf32>
    %114 = arith.addf %113, %112 : vector<16x32xf32>
    %cst_55 = arith.constant 0.000000e+00 : f32
    %115 = vector.broadcast %cst_55 : f32 to vector<16x32xf32>
    %116 = arith.maximumf %114, %115 : vector<16x32xf32>
    %c72 = arith.constant 72 : index
    %c0_56 = arith.constant 0 : index
    %117 = vector.load %arg1[%c72, %c0_56] : memref<152x128xf32, #tpu.memory_space<vmem>>, vector<48x16xf32>
    %c72_57 = arith.constant 72 : index
    %c16_58 = arith.constant 16 : index
    %118 = vector.load %arg1[%c72_57, %c16_58] : memref<152x128xf32, #tpu.memory_space<vmem>>, vector<48x1xf32>
    %cst_59 = arith.constant dense<0.000000e+00> : vector<48x32xf32>
    %119 = tpu.matmul %117, %116, %cst_59 {dimension_numbers = #tpu.dot_dimension_numbers<[1], [0], [0], [1], [0, 0, 1, 1], [], []>} : vector<48x16xf32>, vector<16x32xf32>, vector<48x32xf32> -> vector<48x32xf32>
    %120 = vector.broadcast %118 : vector<48x1xf32> to vector<48x32xf32>
    %121 = arith.addf %119, %120 : vector<48x32xf32>
    %122 = vector.extract_strided_slice %121 {offsets = [0, 0], sizes = [16, 32], strides = [1, 1]} : vector<48x32xf32> to vector<16x32xf32>
    %123 = vector.extract_strided_slice %121 {offsets = [16, 0], sizes = [16, 32], strides = [1, 1]} : vector<48x32xf32> to vector<16x32xf32>
    %124 = vector.extract_strided_slice %121 {offsets = [32, 0], sizes = [16, 32], strides = [1, 1]} : vector<48x32xf32> to vector<16x32xf32>
    %cst_60 = arith.constant dense<0.000000e+00> : vector<32x32xf32>
    %125 = tpu.matmul %122, %123, %cst_60 {dimension_numbers = #tpu.dot_dimension_numbers<[0], [0], [1], [1], [0, 1, 1, 1], [], []>} : vector<16x32xf32>, vector<16x32xf32>, vector<32x32xf32> -> vector<32x32xf32>
    %cst_61 = arith.constant -1.000000e+30 : f32
    %126 = vector.broadcast %cst_61 : f32 to vector<32x32xf32>
    %127 = arith.select %19, %125, %126 : vector<32x32xi1>, vector<32x32xf32>
    %cst_62 = arith.constant dense<0xFF800000> : vector<32xf32>
    %128 = vector.multi_reduction <maximumf>, %127, %cst_62 [0] : vector<32x32xf32> to vector<32xf32>
    %129 = vector.shape_cast %128 : vector<32xf32> to vector<1x32xf32>
    %130 = vector.broadcast %129 : vector<1x32xf32> to vector<32x32xf32>
    %131 = arith.subf %127, %130 : vector<32x32xf32>
    %132 = math.exp %131 : vector<32x32xf32>
    %cst_63 = arith.constant dense<0.000000e+00> : vector<32xf32>
    %133 = vector.multi_reduction <add>, %132, %cst_63 [0] : vector<32x32xf32> to vector<32xf32>
    %134 = vector.shape_cast %133 : vector<32xf32> to vector<1x32xf32>
    %135 = tpu.reciprocal %134 {approx = true} : vector<1x32xf32> -> vector<1x32xf32>
    %136 = vector.broadcast %135 : vector<1x32xf32> to vector<32x32xf32>
    %137 = arith.mulf %132, %136 : vector<32x32xf32>
    %cst_64 = arith.constant dense<0.000000e+00> : vector<16x32xf32>
    %138 = tpu.matmul %124, %137, %cst_64 {dimension_numbers = #tpu.dot_dimension_numbers<[1], [1], [0], [0], [0, 0, 1, 0], [], []>} : vector<16x32xf32>, vector<32x32xf32>, vector<16x32xf32> -> vector<16x32xf32>
    %cst_65 = arith.constant dense<0.000000e+00> : vector<1x32xf32>
    %139 = tpu.matmul %23, %137, %cst_65 {dimension_numbers = #tpu.dot_dimension_numbers<[1], [1], [0], [0], [0, 0, 1, 0], [], []>} : vector<1x32xf32>, vector<32x32xf32>, vector<1x32xf32> -> vector<1x32xf32>
    %cst_66 = arith.constant dense<0xFF800000> : vector<1xf32>
    %140 = vector.multi_reduction <maximumf>, %139, %cst_66 [1] : vector<1x32xf32> to vector<1xf32>
    %141 = vector.shape_cast %140 : vector<1xf32> to vector<1x1xf32>
    %142 = vector.broadcast %141 : vector<1x1xf32> to vector<1x32xf32>
    %143 = arith.subf %139, %142 : vector<1x32xf32>
    %144 = math.exp %143 : vector<1x32xf32>
    %cst_67 = arith.constant dense<0.000000e+00> : vector<1x32xf32>
    %145 = tpu.matmul %144, %22, %cst_67 {dimension_numbers = #tpu.dot_dimension_numbers<[1], [0], [0], [1], [0, 0, 1, 1], [], []>} : vector<1x32xf32>, vector<32x32xf32>, vector<1x32xf32> -> vector<1x32xf32>
    %146 = arith.divf %144, %145 : vector<1x32xf32>
    %c120 = arith.constant 120 : index
    %c0_68 = arith.constant 0 : index
    %147 = vector.load %arg1[%c120, %c0_68] : memref<152x128xf32, #tpu.memory_space<vmem>>, vector<16x16xf32>
    %148 = arith.subi %1, %0 : vector<32x32xi32>
    %c4_i32 = arith.constant 4 : i32
    %149 = vector.broadcast %c4_i32 : i32 to vector<32x32xi32>
    %150 = arith.cmpi eq, %148, %149 : vector<32x32xi32>
    %c4_i32_69 = arith.constant 4 : i32
    %151 = vector.broadcast %c4_i32_69 : i32 to vector<32x32xi32>
    %152 = arith.cmpi sge, %16, %151 : vector<32x32xi32>
    %153 = arith.andi %150, %152 : vector<32x32xi1>
    %cst_70 = arith.constant 1.000000e+00 : f32
    %cst_71 = arith.constant 0.000000e+00 : f32
    %154 = vector.broadcast %cst_70 : f32 to vector<32x32xf32>
    %155 = vector.broadcast %cst_71 : f32 to vector<32x32xf32>
    %156 = arith.select %153, %154, %155 : vector<32x32xi1>, vector<32x32xf32>
    %cst_72 = arith.constant dense<0.000000e+00> : vector<16x32xf32>
    %157 = tpu.matmul %138, %156, %cst_72 {dimension_numbers = #tpu.dot_dimension_numbers<[1], [0], [0], [1], [0, 0, 1, 1], [], []>} : vector<16x32xf32>, vector<32x32xf32>, vector<16x32xf32> -> vector<16x32xf32>
    %cst_73 = arith.constant dense<0.000000e+00> : vector<16x32xf32>
    %158 = tpu.matmul %147, %157, %cst_73 {dimension_numbers = #tpu.dot_dimension_numbers<[1], [0], [0], [1], [0, 0, 1, 1], [], []>} : vector<16x16xf32>, vector<16x32xf32>, vector<16x32xf32> -> vector<16x32xf32>
    %c120_74 = arith.constant 120 : index
    %c16_75 = arith.constant 16 : index
    %159 = vector.load %arg1[%c120_74, %c16_75] : memref<152x128xf32, #tpu.memory_space<vmem>>, vector<16x16xf32>
    %cst_76 = arith.constant dense<0.000000e+00> : vector<16x32xf32>
    %160 = tpu.matmul %138, %64, %cst_76 {dimension_numbers = #tpu.dot_dimension_numbers<[1], [0], [0], [1], [0, 0, 1, 1], [], []>} : vector<16x32xf32>, vector<32x32xf32>, vector<16x32xf32> -> vector<16x32xf32>
    %cst_77 = arith.constant dense<0.000000e+00> : vector<16x32xf32>
    %161 = tpu.matmul %159, %160, %cst_77 {dimension_numbers = #tpu.dot_dimension_numbers<[1], [0], [0], [1], [0, 0, 1, 1], [], []>} : vector<16x16xf32>, vector<16x32xf32>, vector<16x32xf32> -> vector<16x32xf32>
    %162 = arith.addf %158, %161 : vector<16x32xf32>
    %c120_78 = arith.constant 120 : index
    %c32_79 = arith.constant 32 : index
    %163 = vector.load %arg1[%c120_78, %c32_79] : memref<152x128xf32, #tpu.memory_space<vmem>>, vector<16x16xf32>
    %cst_80 = arith.constant dense<0.000000e+00> : vector<16x32xf32>
    %164 = tpu.matmul %163, %138, %cst_80 {dimension_numbers = #tpu.dot_dimension_numbers<[1], [0], [0], [1], [0, 0, 1, 1], [], []>} : vector<16x16xf32>, vector<16x32xf32>, vector<16x32xf32> -> vector<16x32xf32>
    %165 = arith.addf %162, %164 : vector<16x32xf32>
    %c120_81 = arith.constant 120 : index
    %c48_82 = arith.constant 48 : index
    %166 = vector.load %arg1[%c120_81, %c48_82] : memref<152x128xf32, #tpu.memory_space<vmem>>, vector<16x1xf32>
    %167 = vector.broadcast %166 : vector<16x1xf32> to vector<16x32xf32>
    %168 = arith.addf %165, %167 : vector<16x32xf32>
    %cst_83 = arith.constant 0.000000e+00 : f32
    %169 = vector.broadcast %cst_83 : f32 to vector<16x32xf32>
    %170 = arith.maximumf %168, %169 : vector<16x32xf32>
    %c136 = arith.constant 136 : index
    %c0_84 = arith.constant 0 : index
    %171 = vector.load %arg1[%c136, %c0_84] : memref<152x128xf32, #tpu.memory_space<vmem>>, vector<16x16xf32>
    %cst_85 = arith.constant dense<0.000000e+00> : vector<16x32xf32>
    %172 = tpu.matmul %170, %156, %cst_85 {dimension_numbers = #tpu.dot_dimension_numbers<[1], [0], [0], [1], [0, 0, 1, 1], [], []>} : vector<16x32xf32>, vector<32x32xf32>, vector<16x32xf32> -> vector<16x32xf32>
    %cst_86 = arith.constant dense<0.000000e+00> : vector<16x32xf32>
    %173 = tpu.matmul %171, %172, %cst_86 {dimension_numbers = #tpu.dot_dimension_numbers<[1], [0], [0], [1], [0, 0, 1, 1], [], []>} : vector<16x16xf32>, vector<16x32xf32>, vector<16x32xf32> -> vector<16x32xf32>
    %c136_87 = arith.constant 136 : index
    %c16_88 = arith.constant 16 : index
    %174 = vector.load %arg1[%c136_87, %c16_88] : memref<152x128xf32, #tpu.memory_space<vmem>>, vector<16x16xf32>
    %cst_89 = arith.constant dense<0.000000e+00> : vector<16x32xf32>
    %175 = tpu.matmul %170, %64, %cst_89 {dimension_numbers = #tpu.dot_dimension_numbers<[1], [0], [0], [1], [0, 0, 1, 1], [], []>} : vector<16x32xf32>, vector<32x32xf32>, vector<16x32xf32> -> vector<16x32xf32>
    %cst_90 = arith.constant dense<0.000000e+00> : vector<16x32xf32>
    %176 = tpu.matmul %174, %175, %cst_90 {dimension_numbers = #tpu.dot_dimension_numbers<[1], [0], [0], [1], [0, 0, 1, 1], [], []>} : vector<16x16xf32>, vector<16x32xf32>, vector<16x32xf32> -> vector<16x32xf32>
    %177 = arith.addf %173, %176 : vector<16x32xf32>
    %c136_91 = arith.constant 136 : index
    %c32_92 = arith.constant 32 : index
    %178 = vector.load %arg1[%c136_91, %c32_92] : memref<152x128xf32, #tpu.memory_space<vmem>>, vector<16x16xf32>
    %cst_93 = arith.constant dense<0.000000e+00> : vector<16x32xf32>
    %179 = tpu.matmul %178, %170, %cst_93 {dimension_numbers = #tpu.dot_dimension_numbers<[1], [0], [0], [1], [0, 0, 1, 1], [], []>} : vector<16x16xf32>, vector<16x32xf32>, vector<16x32xf32> -> vector<16x32xf32>
    %180 = arith.addf %177, %179 : vector<16x32xf32>
    %c136_94 = arith.constant 136 : index
    %c48_95 = arith.constant 48 : index
    %181 = vector.load %arg1[%c136_94, %c48_95] : memref<152x128xf32, #tpu.memory_space<vmem>>, vector<16x1xf32>
    %182 = vector.broadcast %181 : vector<16x1xf32> to vector<16x32xf32>
    %183 = arith.addf %180, %182 : vector<16x32xf32>
    %cst_96 = arith.constant 0.000000e+00 : f32
    %184 = vector.broadcast %cst_96 : f32 to vector<16x32xf32>
    %185 = arith.maximumf %183, %184 : vector<16x32xf32>
    %186 = vector.broadcast %146 : vector<1x32xf32> to vector<16x32xf32>
    %187 = arith.mulf %116, %186 : vector<16x32xf32>
    %188 = arith.addf %185, %116 : vector<16x32xf32>
    %189 = arith.addf %188, %187 : vector<16x32xf32>
    %cst_97 = arith.constant 0.000000e+00 : f32
    %190 = vector.broadcast %cst_97 : f32 to vector<16x32xf32>
    %191 = arith.maximumf %189, %190 : vector<16x32xf32>
    %c0_98 = arith.constant 0 : index
    %c0_99 = arith.constant 0 : index
    %192 = vector.load %arg2[%c0_98, %c0_99] : memref<16x32xf32, #tpu.memory_space<vmem>>, vector<16x32xf32>
    tpu.vector_store %arg2[%c0_98, %c0_99], %191 {strides = array<i32>} : memref<16x32xf32, #tpu.memory_space<vmem>>, vector<16x32xf32>,
    return
  }
}

</mosaic_0001>

<llo_original>
// kernel: tpu_custom_call.1
$region0: #{tpu_custom_call.1}
  #allocation0 [shape = 'u32[]', space=smem, size = 0x4, offset = 0x4, fixed_abs, tag = 'smem constant byte address 0x4 - core index']
  #allocation1 [shape = 'u32[72,128]{1,0:T(1,128)}', space=vmem, size = 0x9000, scoped, tag = 'internal scratch']
  %s0 = inlined_call_operand.hbm [shape: f32[8,32], index: 0, kind: input, shape index: {}]
  %s1 = inlined_call_operand.hbm [shape: f32[152,128], index: 1, kind: input, shape index: {}]
  %s2 = inlined_call_operand.hbm [shape: f32[16,32], index: 2, kind: output, shape index: {}]
  %s3 = sld [smem:[#allocation0]]
  $region26: #{tpu_custom_call.1} parent=0
    _
  %s5 = ssub.s32 1, %s3
  %s6 = scalar_select 0, %s5, %s3
  $region1: #{tpu_custom_call.1} parent=0
    #allocation2 [shape = 'u8[4096]{0}', space=vmem, size = 0x1000, scoped, tag = 'input window, operand 0, single buffered']
    #allocation3 [shape = 's32[1]{0}', space=sflag, size = 0x4, scoped, tag = 'scoped memory for tpu_custom_call.1']
    #allocation4 [shape = 's32[1]{0}', space=sflag, size = 0x4, scoped, tag = 'scoped memory for tpu_custom_call.1']
    #allocation5 [shape = 'u8[77824]{0}', space=vmem, size = 0x13000, scoped, tag = 'input window, operand 1, single buffered']
    #allocation6 [shape = 's32[1]{0}', space=sflag, size = 0x4, scoped, tag = 'scoped memory for tpu_custom_call.1']
    #allocation7 [shape = 'u8[8192]{0}', space=vmem, size = 0x2000, scoped, tag = 'output window, operand 0, single buffered']
    %7 = vsyncpa [#allocation3], 0
    %8 = vsyncpa [#allocation6], 0
    %9 = vsyncpa [#allocation4], 0
    // Predicated region
    $region2: #{tpu_custom_call.1} parent=1 // pred_check
      _
    $region3: #{tpu_custom_call.1} parent=1 // pred_check_branch
      %11 = sbr.rel (0) target = $region5
    $region4: #{tpu_custom_call.1} parent=1 // pred_region
      %13 = vsyncadd [#allocation3], 0
      %s15 = sshll.u32 %s0, 4
      %s16 = int_to_ptr.hbm [resolvable:$true] %s15
      %s17 = sshll.u32 [#allocation2], 4
      %s18 = int_to_ptr.vmem [resolvable:$true] %s17
      %20 = dma.hbm_to_vmem [thread:$0]  %s16, 128, %s18, [#allocation3]
    $region5: #{tpu_custom_call.1} parent=1 // pred_fallthru
      _
    // Predicated region
    $region6: #{tpu_custom_call.1} parent=1 // pred_check
      _
    $region7: #{tpu_custom_call.1} parent=1 // pred_check_branch
      %22 = sbr.rel (0) target = $region9
    $region8: #{tpu_custom_call.1} parent=1 // pred_region
      %24 = vsyncadd [#allocation6], 0
      %s25 = sshll.u32 %s1, 4
      %s26 = int_to_ptr.hbm [resolvable:$true] %s25
      %s27 = sshll.u32 [#allocation5], 4
      %s28 = int_to_ptr.vmem [resolvable:$true] %s27
      %33 = dma.hbm_to_vmem [thread:$0]  %s26, 2432, %s28, [#allocation6], 128, 128, 8
    $region9: #{tpu_custom_call.1} parent=1 // pred_fallthru
      _
    // Predicated region
    $region10: #{tpu_custom_call.1} parent=1 // pred_check
      _
    $region11: #{tpu_custom_call.1} parent=1 // pred_check_branch
      %35 = sbr.rel (0) target = $region13
    $region12: #{tpu_custom_call.1} parent=1 // pred_region
      %37 = dma.done [#allocation3], 128
    $region13: #{tpu_custom_call.1} parent=1 // pred_fallthru
      _
    // Predicated region
    $region14: #{tpu_custom_call.1} parent=1 // pred_check
      _
    $region15: #{tpu_custom_call.1} parent=1 // pred_check_branch
      %39 = sbr.rel (0) target = $region17
    $region16: #{tpu_custom_call.1} parent=1 // pred_region
      %41 = dma.done [#allocation6], 2432
    $region17: #{tpu_custom_call.1} parent=1 // pred_fallthru
      _
    %v42 = vlaneseq
    %v43 = vshrl.u32 %v42, 7
    %v44 = vadd.s32 %v43, 8
    %v45 = vadd.s32 %v43, 16
    %v46 = vadd.s32 %v43, 24
    %v47 = vlaneseq
    %v48 = vand.u32 %v47, 127
    %vm49 = vcmp.ge.s32.totalorder %v43, 16
    %vm50 = vcmp.ge.s32.totalorder %v44, 16
    %vm51 = vcmp.ge.s32.totalorder %v45, 16
    %vm52 = vcmp.ge.s32.totalorder %v46, 16
    %v53 = vsel %vm49, 1, 0
    %v54 = vsel %vm50, 1, 0
    %v55 = vsel %vm51, 1, 0
    %v56 = vsel %vm52, 1, 0
    %vm57 = vcmp.ge.s32.totalorder %v48, 16
    %v58 = vsel %vm57, 1, 0
    %v59 = vsub.s32 %v48, 16
    %v60 = vsel %vm57, %v59, %v48
    %vm61 = vcmp.eq.s32.totalorder %v53, %v58
    %vm62 = vcmp.eq.s32.totalorder %v54, %v58
    %vm63 = vcmp.eq.s32.totalorder %v55, %v58
    %vm64 = vcmp.eq.s32.totalorder %v56, %v58
    %vm65 = vcmp.le.s32.totalorder %v48, %v43
    %vm66 = vcmp.le.s32.totalorder %v48, %v44
    %vm67 = vcmp.le.s32.totalorder %v48, %v45
    %vm68 = vcmp.le.s32.totalorder %v48, %v46
    %vm69 = vmand %vm61, %vm65
    %vm70 = vmand %vm62, %vm66
    %vm71 = vmand %vm63, %vm67
    %vm72 = vmand %vm64, %vm68
    %v73 = vsel %vm61, 1.0, 0.0
    %v74 = vsel %vm62, 1.0, 0.0
    %v75 = vsel %vm63, 1.0, 0.0
    %v76 = vsel %vm64, 1.0, 0.0
    %v77 = vld [vmem:[#allocation2] sm:$0xff]
    %v78 = vld [vmem:[#allocation5] sm:$0xff]
    %v79 = vld [vmem:[#allocation5 + $0x8] sm:$0xff]
    %v80 = vld [vmem:[#allocation5 + $0x10] sm:$0xff]
    %82 = vset.pattern.permute.xlu0 8
    %83 = vperm.xlu0 %82, %v78
    %v84 = vpop.permute.xlu0 %83
    %87 = vset.pattern.permute.xlu0 8
    %88 = vperm.xlu0 %87, %v79
    %v89 = vpop.permute.xlu0 %88
    %92 = vset.pattern.permute.xlu0 8
    %93 = vperm.xlu0 %92, %v80
    %v94 = vpop.permute.xlu0 %93
    %vm96 = vcmask 64512
    %v97 = vsel %vm96, %v78, 0
    %v99 = vsel %vm96, %v79, 0
    %v101 = vsel %vm96, %v80, 0
    %103 = vmatpush.msra.mxu0 0.0
    %104 = vmatpush.msra.mxu0 0.0
    %105 = vmatpush.msra.mxu0 0.0
    %106 = vmatpush.msra.mxu0 0.0
    %107 = vmatpush.msra.mxu0 0.0
    %108 = vmatpush.msra.mxu0 0.0
    %109 = vmatpush.msra.mxu0 0.0
    %110 = vmatpush.msra.mxu0 0.0
    %111 = vmatpush.msra.mxu0 0.0
    %112 = vmatpush.msra.mxu0 0.0
    %113 = vmatpush.msra.mxu0 0.0
    %114 = vmatpush.msra.mxu0 0.0
    %115 = vmatpush.msra.mxu0 0.0
    %116 = vmatpush.msra.mxu0 0.0
    %117 = vmatpush.msra.mxu0 0.0
    %118 = vmatpush.msra.mxu0 %v77
    %119 = vmatmul.f32.gmra.mxu0 %v97
    %v120 = vpop.f32.mrf.mxu0
    %v121 = vadd.f32 %v84, %v120
    %122 = vmatmul.f32.gmra.mxu0 %v99
    %v123 = vpop.f32.mrf.mxu0
    %v124 = vadd.f32 %v89, %v123
    %125 = vmatmul.f32.gmra.mxu0 %v101
    %v126 = vpop.f32.mrf.mxu0
    %v127 = vadd.f32 %v94, %v126
    %128 = vdwg.mxu0
    %129 = vxpose.xlu0.b32.start [1/16] %v121, 128
    %130 = vxpose.xlu0.b32.cont [2/16] 0.0, 128
    %131 = vxpose.xlu0.b32.cont [3/16] 0.0, 128
    %132 = vxpose.xlu0.b32.cont [4/16] 0.0, 128
    %133 = vxpose.xlu0.b32.cont [5/16] 0.0, 128
    %134 = vxpose.xlu0.b32.cont [6/16] 0.0, 128
    %135 = vxpose.xlu0.b32.cont [7/16] 0.0, 128
    %136 = vxpose.xlu0.b32.cont [8/16] 0.0, 128
    %137 = vxpose.xlu0.b32.cont [9/16] 0.0, 128
    %138 = vxpose.xlu0.b32.cont [10/16] 0.0, 128
    %139 = vxpose.xlu0.b32.cont [11/16] 0.0, 128
    %140 = vxpose.xlu0.b32.cont [12/16] 0.0, 128
    %141 = vxpose.xlu0.b32.cont [13/16] 0.0, 128
    %142 = vxpose.xlu0.b32.cont [14/16] 0.0, 128
    %143 = vxpose.xlu0.b32.cont [15/16] 0.0, 128
    %144 = vxpose.xlu0.b32.end [16/16] 0.0, 128
    %v145 = vpop.trf.xlu0
    %v146 = vpop.trf.xlu0
    %v147 = vpop.trf.xlu0
    %v148 = vpop.trf.xlu0
    %v149 = vpop.trf.xlu0
    %v150 = vpop.trf.xlu0
    %v151 = vpop.trf.xlu0
    %v152 = vpop.trf.xlu0
    %v153 = vpop.trf.xlu0
    %v154 = vpop.trf.xlu0
    %v155 = vpop.trf.xlu0
    %v156 = vpop.trf.xlu0
    %v157 = vpop.trf.xlu0
    %v158 = vpop.trf.xlu0
    %v159 = vpop.trf.xlu0
    %v160 = vpop.trf.xlu0
    %v162 = vsel %vm96, %v145, 0
    %v165 = vsel %vm96, %v146, 0
    %v168 = vsel %vm96, %v147, 0
    %v171 = vsel %vm96, %v148, 0
    %173 = vmatpush.msra.mxu0 0.0
    %174 = vmatpush.msra.mxu0 0.0
    %175 = vmatpush.msra.mxu0 0.0
    %176 = vmatpush.msra.mxu0 0.0
    %177 = vmatpush.msra.mxu0 0.0
    %178 = vmatpush.msra.mxu0 0.0
    %179 = vmatpush.msra.mxu0 0.0
    %180 = vmatpush.msra.mxu0 0.0
    %181 = vmatpush.msra.mxu0 0.0
    %182 = vmatpush.msra.mxu0 0.0
    %183 = vmatpush.msra.mxu0 0.0
    %184 = vmatpush.msra.mxu0 0.0
    %185 = vmatpush.msra.mxu0 0.0
    %186 = vmatpush.msra.mxu0 0.0
    %187 = vmatpush.msra.mxu0 0.0
    %188 = vmatpush.msra.mxu0 %v124
    %189 = vmatmul.f32.gmra.mxu0 %v162
    %v190 = vpop.f32.mrf.mxu0
    %v191 = vadd.f32 0.0, %v190
    %192 = vmatmul.f32.gmra.mxu0 %v165
    %v193 = vpop.f32.mrf.mxu0
    %v194 = vadd.f32 0.0, %v193
    %195 = vmatmul.f32.gmra.mxu0 %v168
    %v196 = vpop.f32.mrf.mxu0
    %v197 = vadd.f32 0.0, %v196
    %198 = vmatmul.f32.gmra.mxu0 %v171
    %v199 = vpop.f32.mrf.mxu0
    %v200 = vadd.f32 0.0, %v199
    %201 = vdwg.mxu0
    %v202 = vsel %vm69, %v191, -1e+30
    %v203 = vsel %vm70, %v194, -1e+30
    %v204 = vsel %vm71, %v197, -1e+30
    %v205 = vsel %vm72, %v200, -1e+30
    %vm206 = vcmask 261120
    %v207 = vsel %vm206, %v202, -inf
    %v208 = vsel %vm206, %v203, -inf
    %v209 = vsel %vm206, %v204, -inf
    %v210 = vsel %vm206, %v205, -inf
    %v211 = vmax.f32 %v207, %v208
    %v212 = vmax.f32 %v209, %v210
    %v213 = vmax.f32 %v211, %v212
    %v214 = vrot.slane %v213, 4
    %v215 = vmax.f32 %v213, %v214
    %v216 = vrot.slane %v215, 2
    %v217 = vmax.f32 %v215, %v216
    %v218 = vrot.slane %v217, 1
    %v219 = vmax.f32 %v217, %v218
    %v220 = vsub.f32 %v202, %v219
    %v221 = vsub.f32 %v203, %v219
    %v222 = vsub.f32 %v204, %v219
    %v223 = vsub.f32 %v205, %v219
    %v224 = vmul.f32 %v220, 1.442695
    %v225 = vpow.pop %v224
    %v226 = vmul.f32 %v221, 1.442695
    %v227 = vpow.pop %v226
    %v228 = vmul.f32 %v222, 1.442695
    %v229 = vpow.pop %v228
    %v230 = vmul.f32 %v223, 1.442695
    %v231 = vpow.pop %v230
    %v232 = vsel %vm206, %v225, 0.0
    %v233 = vsel %vm206, %v227, 0.0
    %v234 = vadd.f32 %v232, %v233
    %v235 = vsel %vm206, %v229, 0.0
    %v236 = vadd.f32 %v234, %v235
    %v237 = vsel %vm206, %v231, 0.0
    %v238 = vadd.f32 %v236, %v237
    %v239 = vrot.slane %v238, 4
    %v240 = vadd.f32 %v238, %v239
    %v241 = vrot.slane %v240, 2
    %v242 = vadd.f32 %v240, %v241
    %v243 = vrot.slane %v242, 1
    %v244 = vadd.f32 %v242, %v243
    %v245 = vrcp.pop %v244
    %v246 = vmul.f32 %v225, %v245
    %v247 = vmul.f32 %v227, %v245
    %v248 = vmul.f32 %v229, %v245
    %v249 = vmul.f32 %v231, %v245
    %v251 = vsel %vm206, %v127, 0
    %v254 = vsel %vm206, %v246, 0
    %v257 = vsel %vm206, %v247, 0
    %v260 = vsel %vm206, %v248, 0
    %v263 = vsel %vm206, %v249, 0
    %265 = vmatpush.xpose.msra.mxu0 0.0
    %266 = vmatpush.xpose.msra.mxu0 0.0
    %267 = vmatpush.xpose.msra.mxu0 0.0
    %268 = vmatpush.xpose.msra.mxu0 0.0
    %269 = vmatpush.xpose.msra.mxu0 0.0
    %270 = vmatpush.xpose.msra.mxu0 0.0
    %271 = vmatpush.xpose.msra.mxu0 0.0
    %272 = vmatpush.xpose.msra.mxu0 0.0
    %273 = vmatpush.xpose.msra.mxu0 0.0
    %274 = vmatpush.xpose.msra.mxu0 0.0
    %275 = vmatpush.xpose.msra.mxu0 0.0
    %276 = vmatpush.xpose.msra.mxu0 0.0
    %277 = vmatpush.xpose.msra.mxu0 %v263
    %278 = vmatpush.xpose.msra.mxu0 %v260
    %279 = vmatpush.xpose.msra.mxu0 %v257
    %280 = vmatpush.xpose.msra.mxu0 %v254
    %281 = vmatmul.f32.gmra.mxu0 %v251
    %v282 = vpop.f32.mrf.mxu0
    %v283 = vadd.f32 0.0, %v282
    %284 = vdwg.mxu0
    %v286 = vsel %vm206, 1.0, 0
    %288 = vmatpush.xpose.msra.mxu0 0.0
    %289 = vmatpush.xpose.msra.mxu0 0.0
    %290 = vmatpush.xpose.msra.mxu0 0.0
    %291 = vmatpush.xpose.msra.mxu0 0.0
    %292 = vmatpush.xpose.msra.mxu0 0.0
    %293 = vmatpush.xpose.msra.mxu0 0.0
    %294 = vmatpush.xpose.msra.mxu0 0.0
    %295 = vmatpush.xpose.msra.mxu0 0.0
    %296 = vmatpush.xpose.msra.mxu0 0.0
    %297 = vmatpush.xpose.msra.mxu0 0.0
    %298 = vmatpush.xpose.msra.mxu0 0.0
    %299 = vmatpush.xpose.msra.mxu0 0.0
    %300 = vmatpush.xpose.msra.mxu0 %v263
    %301 = vmatpush.xpose.msra.mxu0 %v260
    %302 = vmatpush.xpose.msra.mxu0 %v257
    %303 = vmatpush.xpose.msra.mxu0 %v254
    %304 = vmatmul.f32.gmra.mxu0 %v286
    %v305 = vpop.f32.mrf.mxu0
    %v306 = vadd.f32 0.0, %v305
    %307 = vdwg.mxu0
    %vm308 = vcmask 253952
    %v309 = vsel %vm308, %v306, -inf
    %310 = vmax.xlane.f32.xlu0 %v309
    %v311 = vpop.xlane.xlu0 %310
    %v312 = vsub.f32 %v306, %v311
    %v313 = vmul.f32 %v312, 1.442695
    %v314 = vpow.pop %v313
    %v316 = vsel %vm206, %v314, 0
    %318 = vmatpush.msra.mxu0 0.0
    %319 = vmatpush.msra.mxu0 0.0
    %320 = vmatpush.msra.mxu0 0.0
    %321 = vmatpush.msra.mxu0 0.0
    %322 = vmatpush.msra.mxu0 0.0
    %323 = vmatpush.msra.mxu0 0.0
    %324 = vmatpush.msra.mxu0 0.0
    %325 = vmatpush.msra.mxu0 0.0
    %326 = vmatpush.msra.mxu0 0.0
    %327 = vmatpush.msra.mxu0 0.0
    %328 = vmatpush.msra.mxu0 0.0
    %329 = vmatpush.msra.mxu0 0.0
    %330 = vmatpush.msra.mxu0 %v76
    %331 = vmatpush.msra.mxu0 %v75
    %332 = vmatpush.msra.mxu0 %v74
    %333 = vmatpush.msra.mxu0 %v73
    %334 = vmatmul.f32.gmra.mxu0 %v316
    %v335 = vpop.f32.mrf.mxu0
    %v336 = vadd.f32 0.0, %v335
    %337 = vdwg.mxu0
    %v338 = vrcp.pop %v336
    %v339 = vmul.f32 %v336, %v338
    %v340 = vsub.f32 1.0, %v339
    %v341 = vmul.f32 %v338, %v340
    %v342 = vadd.f32 %v338, %v341
    %vm343 = vweird.f32 %v336
    %vm344 = vweird.f32 %v338
    %vm345 = vmor %vm343, %vm344
    %v346 = vsel %vm345, %v338, %v342
    %v347 = vand.u32 2147483647, %v336
    %vm348 = vcmp.eq.f32.partialorder %v347, 8.507059e+37
    %v349 = vand.u32 %v336, 2147483648
    %v350 = vor.u32 1.1754944e-38, %v349
    %v351 = vsel %vm348, %v350, %v346
    %v352 = vmul.f32 %v314, %v351
    %v353 = vld [vmem:[#allocation5 + $0x18] sm:$0xff]
    %v354 = vld [vmem:[#allocation5 + $0x20] sm:$0xff]
    %v355 = vsub.s32 %v48, %v43
    %v356 = vsub.s32 %v48, %v44
    %v357 = vsub.s32 %v48, %v45
    %v358 = vsub.s32 %v48, %v46
    %vm359 = vcmp.eq.s32.totalorder %v355, 2
    %vm360 = vcmp.eq.s32.totalorder %v356, 2
    %vm361 = vcmp.eq.s32.totalorder %v357, 2
    %vm362 = vcmp.eq.s32.totalorder %v358, 2
    %vm363 = vcmp.ge.s32.totalorder %v60, 2
    %vm364 = vmand %vm359, %vm363
    %vm365 = vmand %vm360, %vm363
    %vm366 = vmand %vm361, %vm363
    %vm367 = vmand %vm362, %vm363
    %v368 = vsel %vm364, 1.0, 0.0
    %v369 = vsel %vm365, 1.0, 0.0
    %v370 = vsel %vm366, 1.0, 0.0
    %v371 = vsel %vm367, 1.0, 0.0
    %v373 = vsel %vm206, %v283, 0
    %375 = vmatpush.msra.mxu0 0.0
    %376 = vmatpush.msra.mxu0 0.0
    %377 = vmatpush.msra.mxu0 0.0
    %378 = vmatpush.msra.mxu0 0.0
    %379 = vmatpush.msra.mxu0 0.0
    %380 = vmatpush.msra.mxu0 0.0
    %381 = vmatpush.msra.mxu0 0.0
    %382 = vmatpush.msra.mxu0 0.0
    %383 = vmatpush.msra.mxu0 0.0
    %384 = vmatpush.msra.mxu0 0.0
    %385 = vmatpush.msra.mxu0 0.0
    %386 = vmatpush.msra.mxu0 0.0
    %387 = vmatpush.msra.mxu0 %v371
    %388 = vmatpush.msra.mxu0 %v370
    %389 = vmatpush.msra.mxu0 %v369
    %390 = vmatpush.msra.mxu0 %v368
    %391 = vmatmul.f32.gmra.mxu0 %v373
    %v392 = vpop.f32.mrf.mxu0
    %v393 = vadd.f32 0.0, %v392
    %394 = vdwg.mxu0
    %vm395 = vcmp.eq.s32.totalorder %v355, 1
    %vm396 = vcmp.eq.s32.totalorder %v356, 1
    %vm397 = vcmp.eq.s32.totalorder %v357, 1
    %vm398 = vcmp.eq.s32.totalorder %v358, 1
    %vm399 = vcmp.ge.s32.totalorder %v60, 1
    %vm400 = vmand %vm395, %vm399
    %vm401 = vmand %vm396, %vm399
    %vm402 = vmand %vm397, %vm399
    %vm403 = vmand %vm398, %vm399
    %v404 = vsel %vm400, 1.0, 0.0
    %v405 = vsel %vm401, 1.0, 0.0
    %v406 = vsel %vm402, 1.0, 0.0
    %v407 = vsel %vm403, 1.0, 0.0
    %408 = vmatpush.msra.mxu0 0.0
    %409 = vmatpush.msra.mxu0 0.0
    %410 = vmatpush.msra.mxu0 0.0
    %411 = vmatpush.msra.mxu0 0.0
    %412 = vmatpush.msra.mxu0 0.0
    %413 = vmatpush.msra.mxu0 0.0
    %414 = vmatpush.msra.mxu0 0.0
    %415 = vmatpush.msra.mxu0 0.0
    %416 = vmatpush.msra.mxu0 0.0
    %417 = vmatpush.msra.mxu0 0.0
    %418 = vmatpush.msra.mxu0 0.0
    %419 = vmatpush.msra.mxu0 0.0
    %420 = vmatpush.msra.mxu0 %v407
    %421 = vmatpush.msra.mxu0 %v406
    %422 = vmatpush.msra.mxu0 %v405
    %423 = vmatpush.msra.mxu0 %v404
    %424 = vmatmul.f32.gmra.mxu0 %v373
    %v425 = vpop.f32.mrf.mxu0
    %v426 = vadd.f32 0.0, %v425
    %427 = vdwg.mxu0
    %430 = vrot.lane.b32.xlu0 %v353, 120
    %v431 = vpop.permute.xlu0 %430
    %432 = vrot.lane.b32.xlu0 %v354, 120
    %v433 = vpop.permute.xlu0 %432
    %v434 = vsel %vm96, %v431, 0
    %v436 = vsel %vm96, %v433, 0
    %438 = vmatpush.msra.mxu0 0.0
    %439 = vmatpush.msra.mxu0 0.0
    %440 = vmatpush.msra.mxu0 0.0
    %441 = vmatpush.msra.mxu0 0.0
    %442 = vmatpush.msra.mxu0 0.0
    %443 = vmatpush.msra.mxu0 0.0
    %444 = vmatpush.msra.mxu0 0.0
    %445 = vmatpush.msra.mxu0 0.0
    %446 = vmatpush.msra.mxu0 0.0
    %447 = vmatpush.msra.mxu0 0.0
    %448 = vmatpush.msra.mxu0 0.0
    %449 = vmatpush.msra.mxu0 0.0
    %450 = vmatpush.msra.mxu0 0.0
    %451 = vmatpush.msra.mxu0 0.0
    %452 = vmatpush.msra.mxu0 0.0
    %453 = vmatpush.msra.mxu0 %v426
    %454 = vmatmul.f32.gmra.mxu0 %v434
    %v455 = vpop.f32.mrf.mxu0
    %v456 = vadd.f32 0.0, %v455
    %457 = vmatmul.f32.gmra.mxu0 %v436
    %v458 = vpop.f32.mrf.mxu0
    %v459 = vadd.f32 0.0, %v458
    %460 = vdwg.mxu0
    %v461 = vsel %vm96, %v353, 0
    %v463 = vsel %vm96, %v354, 0
    %465 = vmatpush.msra.mxu0 0.0
    %466 = vmatpush.msra.mxu0 0.0
    %467 = vmatpush.msra.mxu0 0.0
    %468 = vmatpush.msra.mxu0 0.0
    %469 = vmatpush.msra.mxu0 0.0
    %470 = vmatpush.msra.mxu0 0.0
    %471 = vmatpush.msra.mxu0 0.0
    %472 = vmatpush.msra.mxu0 0.0
    %473 = vmatpush.msra.mxu0 0.0
    %474 = vmatpush.msra.mxu0 0.0
    %475 = vmatpush.msra.mxu0 0.0
    %476 = vmatpush.msra.mxu0 0.0
    %477 = vmatpush.msra.mxu0 0.0
    %478 = vmatpush.msra.mxu0 0.0
    %479 = vmatpush.msra.mxu0 0.0
    %480 = vmatpush.msra.mxu0 %v393
    %481 = vmatmul.f32.gmra.mxu0 %v461
    %v482 = vpop.f32.mrf.mxu0
    %v483 = vadd.f32 %v456, %v482
    %484 = vmatmul.f32.gmra.mxu0 %v463
    %v485 = vpop.f32.mrf.mxu0
    %v486 = vadd.f32 %v459, %v485
    %487 = vdwg.mxu0
    %488 = vrot.lane.b32.xlu0 %v353, 112
    %v489 = vpop.permute.xlu0 %488
    %490 = vrot.lane.b32.xlu0 %v354, 112
    %v491 = vpop.permute.xlu0 %490
    %v492 = vsel %vm96, %v489, 0
    %v494 = vsel %vm96, %v491, 0
    %496 = vmatpush.msra.mxu0 0.0
    %497 = vmatpush.msra.mxu0 0.0
    %498 = vmatpush.msra.mxu0 0.0
    %499 = vmatpush.msra.mxu0 0.0
    %500 = vmatpush.msra.mxu0 0.0
    %501 = vmatpush.msra.mxu0 0.0
    %502 = vmatpush.msra.mxu0 0.0
    %503 = vmatpush.msra.mxu0 0.0
    %504 = vmatpush.msra.mxu0 0.0
    %505 = vmatpush.msra.mxu0 0.0
    %506 = vmatpush.msra.mxu0 0.0
    %507 = vmatpush.msra.mxu0 0.0
    %508 = vmatpush.msra.mxu0 0.0
    %509 = vmatpush.msra.mxu0 0.0
    %510 = vmatpush.msra.mxu0 0.0
    %511 = vmatpush.msra.mxu0 %v283
    %512 = vmatmul.f32.gmra.mxu0 %v492
    %v513 = vpop.f32.mrf.mxu0
    %v514 = vadd.f32 0.0, %v513
    %515 = vmatmul.f32.gmra.mxu0 %v494
    %v516 = vpop.f32.mrf.mxu0
    %v517 = vadd.f32 0.0, %v516
    %518 = vdwg.mxu0
    %v519 = vadd.f32 %v483, %v514
    %v520 = vadd.f32 %v486, %v517
    %521 = vset.pattern.permute.xlu0 24
    %522 = vperm.xlu0 %521, %v353
    %v523 = vpop.permute.xlu0 %522
    %525 = vset.pattern.permute.xlu0 24
    %526 = vperm.xlu0 %525, %v354
    %v527 = vpop.permute.xlu0 %526
    %v529 = vadd.f32 %v519, %v523
    %v530 = vadd.f32 %v520, %v527
    %v531 = vmax.f32 %v529, 0.0
    %v532 = vmax.f32 %v530, 0.0
    %v533 = vld [vmem:[#allocation5 + $0x28] sm:$0xff]
    %v534 = vld [vmem:[#allocation5 + $0x30] sm:$0xff]
    %v536 = vsel %vm206, %v531, 0
    %v539 = vsel %vm206, %v532, 0
    %541 = vmatpush.msra.mxu0 0.0
    %542 = vmatpush.msra.mxu0 0.0
    %543 = vmatpush.msra.mxu0 0.0
    %544 = vmatpush.msra.mxu0 0.0
    %545 = vmatpush.msra.mxu0 0.0
    %546 = vmatpush.msra.mxu0 0.0
    %547 = vmatpush.msra.mxu0 0.0
    %548 = vmatpush.msra.mxu0 0.0
    %549 = vmatpush.msra.mxu0 0.0
    %550 = vmatpush.msra.mxu0 0.0
    %551 = vmatpush.msra.mxu0 0.0
    %552 = vmatpush.msra.mxu0 0.0
    %553 = vmatpush.msra.mxu0 %v371
    %554 = vmatpush.msra.mxu0 %v370
    %555 = vmatpush.msra.mxu0 %v369
    %556 = vmatpush.msra.mxu0 %v368
    %557 = vmatmul.f32.gmra.mxu0 %v536
    %v558 = vpop.f32.mrf.mxu0
    %v559 = vadd.f32 0.0, %v558
    %560 = vmatmul.f32.gmra.mxu0 %v539
    %v561 = vpop.f32.mrf.mxu0
    %v562 = vadd.f32 0.0, %v561
    %563 = vdwg.mxu0
    %564 = vmatpush.msra.mxu0 0.0
    %565 = vmatpush.msra.mxu0 0.0
    %566 = vmatpush.msra.mxu0 0.0
    %567 = vmatpush.msra.mxu0 0.0
    %568 = vmatpush.msra.mxu0 0.0
    %569 = vmatpush.msra.mxu0 0.0
    %570 = vmatpush.msra.mxu0 0.0
    %571 = vmatpush.msra.mxu0 0.0
    %572 = vmatpush.msra.mxu0 0.0
    %573 = vmatpush.msra.mxu0 0.0
    %574 = vmatpush.msra.mxu0 0.0
    %575 = vmatpush.msra.mxu0 0.0
    %576 = vmatpush.msra.mxu0 %v407
    %577 = vmatpush.msra.mxu0 %v406
    %578 = vmatpush.msra.mxu0 %v405
    %579 = vmatpush.msra.mxu0 %v404
    %580 = vmatmul.f32.gmra.mxu0 %v536
    %v581 = vpop.f32.mrf.mxu0
    %v582 = vadd.f32 0.0, %v581
    %583 = vmatmul.f32.gmra.mxu0 %v539
    %v584 = vpop.f32.mrf.mxu0
    %v585 = vadd.f32 0.0, %v584
    %586 = vdwg.mxu0
    %589 = vrot.lane.b32.xlu0 %v533, 112
    %v590 = vpop.permute.xlu0 %589
    %591 = vrot.lane.b32.xlu0 %v534, 112
    %v592 = vpop.permute.xlu0 %591
    %vm593 = vcmask 130048
    %v594 = vsel %vm593, %v590, 0
    %v596 = vsel %vm593, %v592, 0
    %598 = vmatpush.msra.mxu0 0.0
    %599 = vmatpush.msra.mxu0 0.0
    %600 = vmatpush.msra.mxu0 0.0
    %601 = vmatpush.msra.mxu0 0.0
    %602 = vmatpush.msra.mxu0 0.0
    %603 = vmatpush.msra.mxu0 0.0
    %604 = vmatpush.msra.mxu0 0.0
    %605 = vmatpush.msra.mxu0 0.0
    %606 = vmatpush.msra.mxu0 0.0
    %607 = vmatpush.msra.mxu0 0.0
    %608 = vmatpush.msra.mxu0 0.0
    %609 = vmatpush.msra.mxu0 0.0
    %610 = vmatpush.msra.mxu0 0.0
    %611 = vmatpush.msra.mxu0 0.0
    %612 = vmatpush.msra.mxu0 %v585
    %613 = vmatpush.msra.mxu0 %v582
    %614 = vmatmul.f32.gmra.mxu0 %v594
    %v615 = vpop.f32.mrf.mxu0
    %v616 = vadd.f32 0.0, %v615
    %617 = vmatmul.f32.gmra.mxu0 %v596
    %v618 = vpop.f32.mrf.mxu0
    %v619 = vadd.f32 0.0, %v618
    %620 = vdwg.mxu0
    %v621 = vsel %vm593, %v533, 0
    %v623 = vsel %vm593, %v534, 0
    %625 = vmatpush.msra.mxu0 0.0
    %626 = vmatpush.msra.mxu0 0.0
    %627 = vmatpush.msra.mxu0 0.0
    %628 = vmatpush.msra.mxu0 0.0
    %629 = vmatpush.msra.mxu0 0.0
    %630 = vmatpush.msra.mxu0 0.0
    %631 = vmatpush.msra.mxu0 0.0
    %632 = vmatpush.msra.mxu0 0.0
    %633 = vmatpush.msra.mxu0 0.0
    %634 = vmatpush.msra.mxu0 0.0
    %635 = vmatpush.msra.mxu0 0.0
    %636 = vmatpush.msra.mxu0 0.0
    %637 = vmatpush.msra.mxu0 0.0
    %638 = vmatpush.msra.mxu0 0.0
    %639 = vmatpush.msra.mxu0 %v562
    %640 = vmatpush.msra.mxu0 %v559
    %641 = vmatmul.f32.gmra.mxu0 %v621
    %v642 = vpop.f32.mrf.mxu0
    %v643 = vadd.f32 %v616, %v642
    %644 = vmatmul.f32.gmra.mxu0 %v623
    %v645 = vpop.f32.mrf.mxu0
    %v646 = vadd.f32 %v619, %v645
    %647 = vdwg.mxu0
    %648 = vrot.lane.b32.xlu0 %v533, 96
    %v649 = vpop.permute.xlu0 %648
    %650 = vrot.lane.b32.xlu0 %v534, 96
    %v651 = vpop.permute.xlu0 %650
    %v652 = vsel %vm593, %v649, 0
    %v654 = vsel %vm593, %v651, 0
    %656 = vmatpush.msra.mxu0 0.0
    %657 = vmatpush.msra.mxu0 0.0
    %658 = vmatpush.msra.mxu0 0.0
    %659 = vmatpush.msra.mxu0 0.0
    %660 = vmatpush.msra.mxu0 0.0
    %661 = vmatpush.msra.mxu0 0.0
    %662 = vmatpush.msra.mxu0 0.0
    %663 = vmatpush.msra.mxu0 0.0
    %664 = vmatpush.msra.mxu0 0.0
    %665 = vmatpush.msra.mxu0 0.0
    %666 = vmatpush.msra.mxu0 0.0
    %667 = vmatpush.msra.mxu0 0.0
    %668 = vmatpush.msra.mxu0 0.0
    %669 = vmatpush.msra.mxu0 0.0
    %670 = vmatpush.msra.mxu0 %v532
    %671 = vmatpush.msra.mxu0 %v531
    %672 = vmatmul.f32.gmra.mxu0 %v652
    %v673 = vpop.f32.mrf.mxu0
    %v674 = vadd.f32 0.0, %v673
    %675 = vmatmul.f32.gmra.mxu0 %v654
    %v676 = vpop.f32.mrf.mxu0
    %v677 = vadd.f32 0.0, %v676
    %678 = vdwg.mxu0
    %v679 = vadd.f32 %v643, %v674
    %v680 = vadd.f32 %v646, %v677
    %681 = vset.pattern.permute.xlu0 48
    %682 = vperm.xlu0 %681, %v533
    %v683 = vpop.permute.xlu0 %682
    %685 = vset.pattern.permute.xlu0 48
    %686 = vperm.xlu0 %685, %v534
    %v687 = vpop.permute.xlu0 %686
    %v689 = vadd.f32 %v679, %v683
    %v690 = vadd.f32 %v680, %v687
    %v691 = vmax.f32 %v689, 0.0
    %v692 = vmax.f32 %v690, 0.0
    %v693 = vld [vmem:[#allocation5 + $0x38] sm:$0xff]
    %v694 = vld [vmem:[#allocation5 + $0x40] sm:$0xff]
    %696 = vset.pattern.permute.xlu0 8
    %697 = vperm.xlu0 %696, %v693
    %v698 = vpop.permute.xlu0 %697
    %701 = vset.pattern.permute.xlu0 8
    %702 = vperm.xlu0 %701, %v694
    %v703 = vpop.permute.xlu0 %702
    %v705 = vsel %vm96, %v693, 0
    %v707 = vsel %vm96, %v694, 0
    %709 = vmatpush.msra.mxu0 0.0
    %710 = vmatpush.msra.mxu0 0.0
    %711 = vmatpush.msra.mxu0 0.0
    %712 = vmatpush.msra.mxu0 0.0
    %713 = vmatpush.msra.mxu0 0.0
    %714 = vmatpush.msra.mxu0 0.0
    %715 = vmatpush.msra.mxu0 0.0
    %716 = vmatpush.msra.mxu0 0.0
    %717 = vmatpush.msra.mxu0 0.0
    %718 = vmatpush.msra.mxu0 0.0
    %719 = vmatpush.msra.mxu0 0.0
    %720 = vmatpush.msra.mxu0 0.0
    %721 = vmatpush.msra.mxu0 0.0
    %722 = vmatpush.msra.mxu0 0.0
    %723 = vmatpush.msra.mxu0 0.0
    %724 = vmatpush.msra.mxu0 %v77
    %725 = vmatmul.f32.gmra.mxu0 %v705
    %v726 = vpop.f32.mrf.mxu0
    %v727 = vadd.f32 %v698, %v726
    %728 = vmatmul.f32.gmra.mxu0 %v707
    %v729 = vpop.f32.mrf.mxu0
    %v730 = vadd.f32 %v703, %v729
    %731 = vdwg.mxu0
    %v732 = vperm.slane %v352, 0
    %v733 = vmul.f32 %v77, %v732
    %734 = vmatpush.msra.mxu0 0.0
    %735 = vmatpush.msra.mxu0 0.0
    %736 = vmatpush.msra.mxu0 0.0
    %737 = vmatpush.msra.mxu0 0.0
    %738 = vmatpush.msra.mxu0 0.0
    %739 = vmatpush.msra.mxu0 0.0
    %740 = vmatpush.msra.mxu0 0.0
    %741 = vmatpush.msra.mxu0 0.0
    %742 = vmatpush.msra.mxu0 0.0
    %743 = vmatpush.msra.mxu0 0.0
    %744 = vmatpush.msra.mxu0 0.0
    %745 = vmatpush.msra.mxu0 0.0
    %746 = vmatpush.msra.mxu0 0.0
    %747 = vmatpush.msra.mxu0 0.0
    %748 = vmatpush.msra.mxu0 0.0
    %749 = vmatpush.msra.mxu0 %v733
    %750 = vmatmul.f32.gmra.mxu0 %v705
    %v751 = vpop.f32.mrf.mxu0
    %v752 = vadd.f32 %v698, %v751
    %753 = vmatmul.f32.gmra.mxu0 %v707
    %v754 = vpop.f32.mrf.mxu0
    %v755 = vadd.f32 %v703, %v754
    %756 = vdwg.mxu0
    %v757 = vadd.f32 %v691, %v727
    %v758 = vadd.f32 %v692, %v730
    %v759 = vadd.f32 %v757, %v752
    %v760 = vadd.f32 %v758, %v755
    %v761 = vmax.f32 %v759, 0.0
    %v762 = vmax.f32 %v760, 0.0
    %v763 = vld [vmem:[#allocation5 + $0x48] sm:$0xff]
    %v764 = vld [vmem:[#allocation5 + $0x50] sm:$0xff]
    %v765 = vld [vmem:[#allocation5 + $0x58] sm:$0xff]
    %v766 = vld [vmem:[#allocation5 + $0x60] sm:$0xff]
    %v767 = vld [vmem:[#allocation5 + $0x68] sm:$0xff]
    %v768 = vld [vmem:[#allocation5 + $0x70] sm:$0xff]
    %770 = vset.pattern.permute.xlu0 16
    %771 = vperm.xlu0 %770, %v763
    %v772 = vpop.permute.xlu0 %771
    %775 = vset.pattern.permute.xlu0 16
    %776 = vperm.xlu0 %775, %v764
    %v777 = vpop.permute.xlu0 %776
    %780 = vset.pattern.permute.xlu0 16
    %781 = vperm.xlu0 %780, %v765
    %v782 = vpop.permute.xlu0 %781
    %785 = vset.pattern.permute.xlu0 16
    %786 = vperm.xlu0 %785, %v766
    %v787 = vpop.permute.xlu0 %786
    %790 = vset.pattern.permute.xlu0 16
    %791 = vperm.xlu0 %790, %v767
    %v792 = vpop.permute.xlu0 %791
    %795 = vset.pattern.permute.xlu0 16
    %796 = vperm.xlu0 %795, %v768
    %v797 = vpop.permute.xlu0 %796
    %v799 = vsel %vm593, %v763, 0
    %v801 = vsel %vm593, %v764, 0
    %v803 = vsel %vm593, %v765, 0
    %v805 = vsel %vm593, %v766, 0
    %v807 = vsel %vm593, %v767, 0
    %v809 = vsel %vm593, %v768, 0
    %811 = vmatpush.msra.mxu0 0.0
    %812 = vmatpush.msra.mxu0 0.0
    %813 = vmatpush.msra.mxu0 0.0
    %814 = vmatpush.msra.mxu0 0.0
    %815 = vmatpush.msra.mxu0 0.0
    %816 = vmatpush.msra.mxu0 0.0
    %817 = vmatpush.msra.mxu0 0.0
    %818 = vmatpush.msra.mxu0 0.0
    %819 = vmatpush.msra.mxu0 0.0
    %820 = vmatpush.msra.mxu0 0.0
    %821 = vmatpush.msra.mxu0 0.0
    %822 = vmatpush.msra.mxu0 0.0
    %823 = vmatpush.msra.mxu0 0.0
    %824 = vmatpush.msra.mxu0 0.0
    %825 = vmatpush.msra.mxu0 %v762
    %826 = vmatpush.msra.mxu0 %v761
    %827 = vmatmul.f32.gmra.mxu0 %v799
    %v828 = vpop.f32.mrf.mxu0
    %v829 = vadd.f32 %v772, %v828
    %830 = vmatmul.f32.gmra.mxu0 %v801
    %v831 = vpop.f32.mrf.mxu0
    %v832 = vadd.f32 %v777, %v831
    %833 = vmatmul.f32.gmra.mxu0 %v803
    %v834 = vpop.f32.mrf.mxu0
    %v835 = vadd.f32 %v782, %v834
    %836 = vmatmul.f32.gmra.mxu0 %v805
    %v837 = vpop.f32.mrf.mxu0
    %v838 = vadd.f32 %v787, %v837
    %839 = vmatmul.f32.gmra.mxu0 %v807
    %v840 = vpop.f32.mrf.mxu0
    %v841 = vadd.f32 %v792, %v840
    %842 = vmatmul.f32.gmra.mxu0 %v809
    %v843 = vpop.f32.mrf.mxu0
    %v844 = vadd.f32 %v797, %v843
    %845 = vdwg.mxu0
    %846 = vxpose.xlu0.b32.start [1/16] %v829, 128
    %847 = vxpose.xlu0.b32.cont [2/16] %v832, 128
    %848 = vxpose.xlu0.b32.cont [3/16] 0.0, 128
    %849 = vxpose.xlu0.b32.cont [4/16] 0.0, 128
    %850 = vxpose.xlu0.b32.cont [5/16] 0.0, 128
    %851 = vxpose.xlu0.b32.cont [6/16] 0.0, 128
    %852 = vxpose.xlu0.b32.cont [7/16] 0.0, 128
    %853 = vxpose.xlu0.b32.cont [8/16] 0.0, 128
    %854 = vxpose.xlu0.b32.cont [9/16] 0.0, 128
    %855 = vxpose.xlu0.b32.cont [10/16] 0.0, 128
    %856 = vxpose.xlu0.b32.cont [11/16] 0.0, 128
    %857 = vxpose.xlu0.b32.cont [12/16] 0.0, 128
    %858 = vxpose.xlu0.b32.cont [13/16] 0.0, 128
    %859 = vxpose.xlu0.b32.cont [14/16] 0.0, 128
    %860 = vxpose.xlu0.b32.cont [15/16] 0.0, 128
    %861 = vxpose.xlu0.b32.end [16/16] 0.0, 128
    %v862 = vpop.trf.xlu0
    %v863 = vpop.trf.xlu0
    %v864 = vpop.trf.xlu0
    %v865 = vpop.trf.xlu0
    %v866 = vpop.trf.xlu0
    %v867 = vpop.trf.xlu0
    %v868 = vpop.trf.xlu0
    %v869 = vpop.trf.xlu0
    %v870 = vpop.trf.xlu0
    %v871 = vpop.trf.xlu0
    %v872 = vpop.trf.xlu0
    %v873 = vpop.trf.xlu0
    %v874 = vpop.trf.xlu0
    %v875 = vpop.trf.xlu0
    %v876 = vpop.trf.xlu0
    %v877 = vpop.trf.xlu0
    %v879 = vsel %vm593, %v862, 0
    %v882 = vsel %vm593, %v863, 0
    %v885 = vsel %vm593, %v864, 0
    %v888 = vsel %vm593, %v865, 0
    %890 = vmatpush.msra.mxu0 0.0
    %891 = vmatpush.msra.mxu0 0.0
    %892 = vmatpush.msra.mxu0 0.0
    %893 = vmatpush.msra.mxu0 0.0
    %894 = vmatpush.msra.mxu0 0.0
    %895 = vmatpush.msra.mxu0 0.0
    %896 = vmatpush.msra.mxu0 0.0
    %897 = vmatpush.msra.mxu0 0.0
    %898 = vmatpush.msra.mxu0 0.0
    %899 = vmatpush.msra.mxu0 0.0
    %900 = vmatpush.msra.mxu0 0.0
    %901 = vmatpush.msra.mxu0 0.0
    %902 = vmatpush.msra.mxu0 0.0
    %903 = vmatpush.msra.mxu0 0.0
    %904 = vmatpush.msra.mxu0 %v838
    %905 = vmatpush.msra.mxu0 %v835
    %906 = vmatmul.f32.gmra.mxu0 %v879
    %v907 = vpop.f32.mrf.mxu0
    %v908 = vadd.f32 0.0, %v907
    %909 = vmatmul.f32.gmra.mxu0 %v882
    %v910 = vpop.f32.mrf.mxu0
    %v911 = vadd.f32 0.0, %v910
    %912 = vmatmul.f32.gmra.mxu0 %v885
    %v913 = vpop.f32.mrf.mxu0
    %v914 = vadd.f32 0.0, %v913
    %915 = vmatmul.f32.gmra.mxu0 %v888
    %v916 = vpop.f32.mrf.mxu0
    %v917 = vadd.f32 0.0, %v916
    %918 = vdwg.mxu0
    %v919 = vsel %vm69, %v908, -1e+30
    %v920 = vsel %vm70, %v911, -1e+30
    %v921 = vsel %vm71, %v914, -1e+30
    %v922 = vsel %vm72, %v917, -1e+30
    %v923 = vsel %vm206, %v919, -inf
    %v924 = vsel %vm206, %v920, -inf
    %v925 = vsel %vm206, %v921, -inf
    %v926 = vsel %vm206, %v922, -inf
    %v927 = vmax.f32 %v923, %v924
    %v928 = vmax.f32 %v925, %v926
    %v929 = vmax.f32 %v927, %v928
    %v930 = vrot.slane %v929, 4
    %v931 = vmax.f32 %v929, %v930
    %v932 = vrot.slane %v931, 2
    %v933 = vmax.f32 %v931, %v932
    %v934 = vrot.slane %v933, 1
    %v935 = vmax.f32 %v933, %v934
    %v936 = vsub.f32 %v919, %v935
    %v937 = vsub.f32 %v920, %v935
    %v938 = vsub.f32 %v921, %v935
    %v939 = vsub.f32 %v922, %v935
    %v940 = vmul.f32 %v936, 1.442695
    %v941 = vpow.pop %v940
    %v942 = vmul.f32 %v937, 1.442695
    %v943 = vpow.pop %v942
    %v944 = vmul.f32 %v938, 1.442695
    %v945 = vpow.pop %v944
    %v946 = vmul.f32 %v939, 1.442695
    %v947 = vpow.pop %v946
    %v948 = vsel %vm206, %v941, 0.0
    %v949 = vsel %vm206, %v943, 0.0
    %v950 = vadd.f32 %v948, %v949
    %v951 = vsel %vm206, %v945, 0.0
    %v952 = vadd.f32 %v950, %v951
    %v953 = vsel %vm206, %v947, 0.0
    %v954 = vadd.f32 %v952, %v953
    %v955 = vrot.slane %v954, 4
    %v956 = vadd.f32 %v954, %v955
    %v957 = vrot.slane %v956, 2
    %v958 = vadd.f32 %v956, %v957
    %v959 = vrot.slane %v958, 1
    %v960 = vadd.f32 %v958, %v959
    %v961 = vrcp.pop %v960
    %v962 = vmul.f32 %v941, %v961
    %v963 = vmul.f32 %v943, %v961
    %v964 = vmul.f32 %v945, %v961
    %v965 = vmul.f32 %v947, %v961
    %v967 = vsel %vm206, %v841, 0
    %v970 = vsel %vm206, %v844, 0
    %v973 = vsel %vm206, %v962, 0
    %v976 = vsel %vm206, %v963, 0
    %v979 = vsel %vm206, %v964, 0
    %v982 = vsel %vm206, %v965, 0
    %984 = vmatpush.xpose.msra.mxu0 0.0
    %985 = vmatpush.xpose.msra.mxu0 0.0
    %986 = vmatpush.xpose.msra.mxu0 0.0
    %987 = vmatpush.xpose.msra.mxu0 0.0
    %988 = vmatpush.xpose.msra.mxu0 0.0
    %989 = vmatpush.xpose.msra.mxu0 0.0
    %990 = vmatpush.xpose.msra.mxu0 0.0
    %991 = vmatpush.xpose.msra.mxu0 0.0
    %992 = vmatpush.xpose.msra.mxu0 0.0
    %993 = vmatpush.xpose.msra.mxu0 0.0
    %994 = vmatpush.xpose.msra.mxu0 0.0
    %995 = vmatpush.xpose.msra.mxu0 0.0
    %996 = vmatpush.xpose.msra.mxu0 %v982
    %997 = vmatpush.xpose.msra.mxu0 %v979
    %998 = vmatpush.xpose.msra.mxu0 %v976
    %999 = vmatpush.xpose.msra.mxu0 %v973
    %1000 = vmatmul.f32.gmra.mxu0 %v967
    %v1001 = vpop.f32.mrf.mxu0
    %v1002 = vadd.f32 0.0, %v1001
    %1003 = vmatmul.f32.gmra.mxu0 %v970
    %v1004 = vpop.f32.mrf.mxu0
    %v1005 = vadd.f32 0.0, %v1004
    %1006 = vdwg.mxu0
    %1007 = vmatpush.xpose.msra.mxu0 0.0
    %1008 = vmatpush.xpose.msra.mxu0 0.0
    %1009 = vmatpush.xpose.msra.mxu0 0.0
    %1010 = vmatpush.xpose.msra.mxu0 0.0
    %1011 = vmatpush.xpose.msra.mxu0 0.0
    %1012 = vmatpush.xpose.msra.mxu0 0.0
    %1013 = vmatpush.xpose.msra.mxu0 0.0
    %1014 = vmatpush.xpose.msra.mxu0 0.0
    %1015 = vmatpush.xpose.msra.mxu0 0.0
    %1016 = vmatpush.xpose.msra.mxu0 0.0
    %1017 = vmatpush.xpose.msra.mxu0 0.0
    %1018 = vmatpush.xpose.msra.mxu0 0.0
    %1019 = vmatpush.xpose.msra.mxu0 %v982
    %1020 = vmatpush.xpose.msra.mxu0 %v979
    %1021 = vmatpush.xpose.msra.mxu0 %v976
    %1022 = vmatpush.xpose.msra.mxu0 %v973
    %1023 = vmatmul.f32.gmra.mxu0 %v286
    %v1024 = vpop.f32.mrf.mxu0
    %v1025 = vadd.f32 0.0, %v1024
    %1026 = vdwg.mxu0
    %v1027 = vsel %vm308, %v1025, -inf
    %1028 = vmax.xlane.f32.xlu0 %v1027
    %v1029 = vpop.xlane.xlu0 %1028
    %v1030 = vsub.f32 %v1025, %v1029
    %v1031 = vmul.f32 %v1030, 1.442695
    %v1032 = vpow.pop %v1031
    %v1034 = vsel %vm206, %v1032, 0
    %1036 = vmatpush.msra.mxu0 0.0
    %1037 = vmatpush.msra.mxu0 0.0
    %1038 = vmatpush.msra.mxu0 0.0
    %1039 = vmatpush.msra.mxu0 0.0
    %1040 = vmatpush.msra.mxu0 0.0
    %1041 = vmatpush.msra.mxu0 0.0
    %1042 = vmatpush.msra.mxu0 0.0
    %1043 = vmatpush.msra.mxu0 0.0
    %1044 = vmatpush.msra.mxu0 0.0
    %1045 = vmatpush.msra.mxu0 0.0
    %1046 = vmatpush.msra.mxu0 0.0
    %1047 = vmatpush.msra.mxu0 0.0
    %1048 = vmatpush.msra.mxu0 %v76
    %1049 = vmatpush.msra.mxu0 %v75
    %1050 = vmatpush.msra.mxu0 %v74
    %1051 = vmatpush.msra.mxu0 %v73
    %1052 = vmatmul.f32.gmra.mxu0 %v1034
    %v1053 = vpop.f32.mrf.mxu0
    %v1054 = vadd.f32 0.0, %v1053
    %1055 = vdwg.mxu0
    %v1056 = vrcp.pop %v1054
    %v1057 = vmul.f32 %v1054, %v1056
    %v1058 = vsub.f32 1.0, %v1057
    %v1059 = vmul.f32 %v1056, %v1058
    %v1060 = vadd.f32 %v1056, %v1059
    %vm1061 = vweird.f32 %v1054
    %vm1062 = vweird.f32 %v1056
    %vm1063 = vmor %vm1061, %vm1062
    %v1064 = vsel %vm1063, %v1056, %v1060
    %v1065 = vand.u32 2147483647, %v1054
    %vm1066 = vcmp.eq.f32.partialorder %v1065, 8.507059e+37
    %v1067 = vand.u32 %v1054, 2147483648
    %v1068 = vor.u32 1.1754944e-38, %v1067
    %v1069 = vsel %vm1066, %v1068, %v1064
    %v1070 = vmul.f32 %v1032, %v1069
    %v1071 = vld [vmem:[#allocation5 + $0x78] sm:$0xff]
    %v1072 = vld [vmem:[#allocation5 + $0x80] sm:$0xff]
    %vm1073 = vcmp.eq.s32.totalorder %v355, 4
    %vm1074 = vcmp.eq.s32.totalorder %v356, 4
    %vm1075 = vcmp.eq.s32.totalorder %v357, 4
    %vm1076 = vcmp.eq.s32.totalorder %v358, 4
    %vm1077 = vcmp.ge.s32.totalorder %v60, 4
    %vm1078 = vmand %vm1073, %vm1077
    %vm1079 = vmand %vm1074, %vm1077
    %vm1080 = vmand %vm1075, %vm1077
    %vm1081 = vmand %vm1076, %vm1077
    %v1082 = vsel %vm1078, 1.0, 0.0
    %v1083 = vsel %vm1079, 1.0, 0.0
    %v1084 = vsel %vm1080, 1.0, 0.0
    %v1085 = vsel %vm1081, 1.0, 0.0
    %v1087 = vsel %vm206, %v1002, 0
    %v1090 = vsel %vm206, %v1005, 0
    %1092 = vmatpush.msra.mxu0 0.0
    %1093 = vmatpush.msra.mxu0 0.0
    %1094 = vmatpush.msra.mxu0 0.0
    %1095 = vmatpush.msra.mxu0 0.0
    %1096 = vmatpush.msra.mxu0 0.0
    %1097 = vmatpush.msra.mxu0 0.0
    %1098 = vmatpush.msra.mxu0 0.0
    %1099 = vmatpush.msra.mxu0 0.0
    %1100 = vmatpush.msra.mxu0 0.0
    %1101 = vmatpush.msra.mxu0 0.0
    %1102 = vmatpush.msra.mxu0 0.0
    %1103 = vmatpush.msra.mxu0 0.0
    %1104 = vmatpush.msra.mxu0 %v1085
    %1105 = vmatpush.msra.mxu0 %v1084
    %1106 = vmatpush.msra.mxu0 %v1083
    %1107 = vmatpush.msra.mxu0 %v1082
    %1108 = vmatmul.f32.gmra.mxu0 %v1087
    %v1109 = vpop.f32.mrf.mxu0
    %v1110 = vadd.f32 0.0, %v1109
    %1111 = vmatmul.f32.gmra.mxu0 %v1090
    %v1112 = vpop.f32.mrf.mxu0
    %v1113 = vadd.f32 0.0, %v1112
    %1114 = vdwg.mxu0
    %1115 = vmatpush.msra.mxu0 0.0
    %1116 = vmatpush.msra.mxu0 0.0
    %1117 = vmatpush.msra.mxu0 0.0
    %1118 = vmatpush.msra.mxu0 0.0
    %1119 = vmatpush.msra.mxu0 0.0
    %1120 = vmatpush.msra.mxu0 0.0
    %1121 = vmatpush.msra.mxu0 0.0
    %1122 = vmatpush.msra.mxu0 0.0
    %1123 = vmatpush.msra.mxu0 0.0
    %1124 = vmatpush.msra.mxu0 0.0
    %1125 = vmatpush.msra.mxu0 0.0
    %1126 = vmatpush.msra.mxu0 0.0
    %1127 = vmatpush.msra.mxu0 %v371
    %1128 = vmatpush.msra.mxu0 %v370
    %1129 = vmatpush.msra.mxu0 %v369
    %1130 = vmatpush.msra.mxu0 %v368
    %1131 = vmatmul.f32.gmra.mxu0 %v1087
    %v1132 = vpop.f32.mrf.mxu0
    %v1133 = vadd.f32 0.0, %v1132
    %1134 = vmatmul.f32.gmra.mxu0 %v1090
    %v1135 = vpop.f32.mrf.mxu0
    %v1136 = vadd.f32 0.0, %v1135
    %1137 = vdwg.mxu0
    %1140 = vrot.lane.b32.xlu0 %v1071, 112
    %v1141 = vpop.permute.xlu0 %1140
    %1142 = vrot.lane.b32.xlu0 %v1072, 112
    %v1143 = vpop.permute.xlu0 %1142
    %v1144 = vsel %vm593, %v1141, 0
    %v1146 = vsel %vm593, %v1143, 0
    %1148 = vmatpush.msra.mxu0 0.0
    %1149 = vmatpush.msra.mxu0 0.0
    %1150 = vmatpush.msra.mxu0 0.0
    %1151 = vmatpush.msra.mxu0 0.0
    %1152 = vmatpush.msra.mxu0 0.0
    %1153 = vmatpush.msra.mxu0 0.0
    %1154 = vmatpush.msra.mxu0 0.0
    %1155 = vmatpush.msra.mxu0 0.0
    %1156 = vmatpush.msra.mxu0 0.0
    %1157 = vmatpush.msra.mxu0 0.0
    %1158 = vmatpush.msra.mxu0 0.0
    %1159 = vmatpush.msra.mxu0 0.0
    %1160 = vmatpush.msra.mxu0 0.0
    %1161 = vmatpush.msra.mxu0 0.0
    %1162 = vmatpush.msra.mxu0 %v1136
    %1163 = vmatpush.msra.mxu0 %v1133
    %1164 = vmatmul.f32.gmra.mxu0 %v1144
    %v1165 = vpop.f32.mrf.mxu0
    %v1166 = vadd.f32 0.0, %v1165
    %1167 = vmatmul.f32.gmra.mxu0 %v1146
    %v1168 = vpop.f32.mrf.mxu0
    %v1169 = vadd.f32 0.0, %v1168
    %1170 = vdwg.mxu0
    %v1171 = vsel %vm593, %v1071, 0
    %v1173 = vsel %vm593, %v1072, 0
    %1175 = vmatpush.msra.mxu0 0.0
    %1176 = vmatpush.msra.mxu0 0.0
    %1177 = vmatpush.msra.mxu0 0.0
    %1178 = vmatpush.msra.mxu0 0.0
    %1179 = vmatpush.msra.mxu0 0.0
    %1180 = vmatpush.msra.mxu0 0.0
    %1181 = vmatpush.msra.mxu0 0.0
    %1182 = vmatpush.msra.mxu0 0.0
    %1183 = vmatpush.msra.mxu0 0.0
    %1184 = vmatpush.msra.mxu0 0.0
    %1185 = vmatpush.msra.mxu0 0.0
    %1186 = vmatpush.msra.mxu0 0.0
    %1187 = vmatpush.msra.mxu0 0.0
    %1188 = vmatpush.msra.mxu0 0.0
    %1189 = vmatpush.msra.mxu0 %v1113
    %1190 = vmatpush.msra.mxu0 %v1110
    %1191 = vmatmul.f32.gmra.mxu0 %v1171
    %v1192 = vpop.f32.mrf.mxu0
    %v1193 = vadd.f32 %v1166, %v1192
    %1194 = vmatmul.f32.gmra.mxu0 %v1173
    %v1195 = vpop.f32.mrf.mxu0
    %v1196 = vadd.f32 %v1169, %v1195
    %1197 = vdwg.mxu0
    %1198 = vrot.lane.b32.xlu0 %v1071, 96
    %v1199 = vpop.permute.xlu0 %1198
    %1200 = vrot.lane.b32.xlu0 %v1072, 96
    %v1201 = vpop.permute.xlu0 %1200
    %v1202 = vsel %vm593, %v1199, 0
    %v1204 = vsel %vm593, %v1201, 0
    %1206 = vmatpush.msra.mxu0 0.0
    %1207 = vmatpush.msra.mxu0 0.0
    %1208 = vmatpush.msra.mxu0 0.0
    %1209 = vmatpush.msra.mxu0 0.0
    %1210 = vmatpush.msra.mxu0 0.0
    %1211 = vmatpush.msra.mxu0 0.0
    %1212 = vmatpush.msra.mxu0 0.0
    %1213 = vmatpush.msra.mxu0 0.0
    %1214 = vmatpush.msra.mxu0 0.0
    %1215 = vmatpush.msra.mxu0 0.0
    %1216 = vmatpush.msra.mxu0 0.0
    %1217 = vmatpush.msra.mxu0 0.0
    %1218 = vmatpush.msra.mxu0 0.0
    %1219 = vmatpush.msra.mxu0 0.0
    %1220 = vmatpush.msra.mxu0 %v1005
    %1221 = vmatpush.msra.mxu0 %v1002
    %1222 = vmatmul.f32.gmra.mxu0 %v1202
    %v1223 = vpop.f32.mrf.mxu0
    %v1224 = vadd.f32 0.0, %v1223
    %1225 = vmatmul.f32.gmra.mxu0 %v1204
    %v1226 = vpop.f32.mrf.mxu0
    %v1227 = vadd.f32 0.0, %v1226
    %1228 = vdwg.mxu0
    %v1229 = vadd.f32 %v1193, %v1224
    %v1230 = vadd.f32 %v1196, %v1227
    %1231 = vset.pattern.permute.xlu0 48
    %1232 = vperm.xlu0 %1231, %v1071
    %v1233 = vpop.permute.xlu0 %1232
    %1235 = vset.pattern.permute.xlu0 48
    %1236 = vperm.xlu0 %1235, %v1072
    %v1237 = vpop.permute.xlu0 %1236
    %v1239 = vadd.f32 %v1229, %v1233
    %v1240 = vadd.f32 %v1230, %v1237
    %v1241 = vmax.f32 %v1239, 0.0
    %v1242 = vmax.f32 %v1240, 0.0
    %v1243 = vld [vmem:[#allocation5 + $0x88] sm:$0xff]
    %v1244 = vld [vmem:[#allocation5 + $0x90] sm:$0xff]
    %v1246 = vsel %vm206, %v1241, 0
    %v1249 = vsel %vm206, %v1242, 0
    %1251 = vmatpush.msra.mxu0 0.0
    %1252 = vmatpush.msra.mxu0 0.0
    %1253 = vmatpush.msra.mxu0 0.0
    %1254 = vmatpush.msra.mxu0 0.0
    %1255 = vmatpush.msra.mxu0 0.0
    %1256 = vmatpush.msra.mxu0 0.0
    %1257 = vmatpush.msra.mxu0 0.0
    %1258 = vmatpush.msra.mxu0 0.0
    %1259 = vmatpush.msra.mxu0 0.0
    %1260 = vmatpush.msra.mxu0 0.0
    %1261 = vmatpush.msra.mxu0 0.0
    %1262 = vmatpush.msra.mxu0 0.0
    %1263 = vmatpush.msra.mxu0 %v1085
    %1264 = vmatpush.msra.mxu0 %v1084
    %1265 = vmatpush.msra.mxu0 %v1083
    %1266 = vmatpush.msra.mxu0 %v1082
    %1267 = vmatmul.f32.gmra.mxu0 %v1246
    %v1268 = vpop.f32.mrf.mxu0
    %v1269 = vadd.f32 0.0, %v1268
    %1270 = vmatmul.f32.gmra.mxu0 %v1249
    %v1271 = vpop.f32.mrf.mxu0
    %v1272 = vadd.f32 0.0, %v1271
    %1273 = vdwg.mxu0
    %1274 = vmatpush.msra.mxu0 0.0
    %1275 = vmatpush.msra.mxu0 0.0
    %1276 = vmatpush.msra.mxu0 0.0
    %1277 = vmatpush.msra.mxu0 0.0
    %1278 = vmatpush.msra.mxu0 0.0
    %1279 = vmatpush.msra.mxu0 0.0
    %1280 = vmatpush.msra.mxu0 0.0
    %1281 = vmatpush.msra.mxu0 0.0
    %1282 = vmatpush.msra.mxu0 0.0
    %1283 = vmatpush.msra.mxu0 0.0
    %1284 = vmatpush.msra.mxu0 0.0
    %1285 = vmatpush.msra.mxu0 0.0
    %1286 = vmatpush.msra.mxu0 %v371
    %1287 = vmatpush.msra.mxu0 %v370
    %1288 = vmatpush.msra.mxu0 %v369
    %1289 = vmatpush.msra.mxu0 %v368
    %1290 = vmatmul.f32.gmra.mxu0 %v1246
    %v1291 = vpop.f32.mrf.mxu0
    %v1292 = vadd.f32 0.0, %v1291
    %1293 = vmatmul.f32.gmra.mxu0 %v1249
    %v1294 = vpop.f32.mrf.mxu0
    %v1295 = vadd.f32 0.0, %v1294
    %1296 = vdwg.mxu0
    %1299 = vrot.lane.b32.xlu0 %v1243, 112
    %v1300 = vpop.permute.xlu0 %1299
    %1301 = vrot.lane.b32.xlu0 %v1244, 112
    %v1302 = vpop.permute.xlu0 %1301
    %v1303 = vsel %vm593, %v1300, 0
    %v1305 = vsel %vm593, %v1302, 0
    %1307 = vmatpush.msra.mxu0 0.0
    %1308 = vmatpush.msra.mxu0 0.0
    %1309 = vmatpush.msra.mxu0 0.0
    %1310 = vmatpush.msra.mxu0 0.0
    %1311 = vmatpush.msra.mxu0 0.0
    %1312 = vmatpush.msra.mxu0 0.0
    %1313 = vmatpush.msra.mxu0 0.0
    %1314 = vmatpush.msra.mxu0 0.0
    %1315 = vmatpush.msra.mxu0 0.0
    %1316 = vmatpush.msra.mxu0 0.0
    %1317 = vmatpush.msra.mxu0 0.0
    %1318 = vmatpush.msra.mxu0 0.0
    %1319 = vmatpush.msra.mxu0 0.0
    %1320 = vmatpush.msra.mxu0 0.0
    %1321 = vmatpush.msra.mxu0 %v1295
    %1322 = vmatpush.msra.mxu0 %v1292
    %1323 = vmatmul.f32.gmra.mxu0 %v1303
    %v1324 = vpop.f32.mrf.mxu0
    %v1325 = vadd.f32 0.0, %v1324
    %1326 = vmatmul.f32.gmra.mxu0 %v1305
    %v1327 = vpop.f32.mrf.mxu0
    %v1328 = vadd.f32 0.0, %v1327
    %1329 = vdwg.mxu0
    %v1330 = vsel %vm593, %v1243, 0
    %v1332 = vsel %vm593, %v1244, 0
    %1334 = vmatpush.msra.mxu0 0.0
    %1335 = vmatpush.msra.mxu0 0.0
    %1336 = vmatpush.msra.mxu0 0.0
    %1337 = vmatpush.msra.mxu0 0.0
    %1338 = vmatpush.msra.mxu0 0.0
    %1339 = vmatpush.msra.mxu0 0.0
    %1340 = vmatpush.msra.mxu0 0.0
    %1341 = vmatpush.msra.mxu0 0.0
    %1342 = vmatpush.msra.mxu0 0.0
    %1343 = vmatpush.msra.mxu0 0.0
    %1344 = vmatpush.msra.mxu0 0.0
    %1345 = vmatpush.msra.mxu0 0.0
    %1346 = vmatpush.msra.mxu0 0.0
    %1347 = vmatpush.msra.mxu0 0.0
    %1348 = vmatpush.msra.mxu0 %v1272
    %1349 = vmatpush.msra.mxu0 %v1269
    %1350 = vmatmul.f32.gmra.mxu0 %v1330
    %v1351 = vpop.f32.mrf.mxu0
    %v1352 = vadd.f32 %v1325, %v1351
    %1353 = vmatmul.f32.gmra.mxu0 %v1332
    %v1354 = vpop.f32.mrf.mxu0
    %v1355 = vadd.f32 %v1328, %v1354
    %1356 = vdwg.mxu0
    %1357 = vrot.lane.b32.xlu0 %v1243, 96
    %v1358 = vpop.permute.xlu0 %1357
    %1359 = vrot.lane.b32.xlu0 %v1244, 96
    %v1360 = vpop.permute.xlu0 %1359
    %v1361 = vsel %vm593, %v1358, 0
    %v1363 = vsel %vm593, %v1360, 0
    %1365 = vmatpush.msra.mxu0 0.0
    %1366 = vmatpush.msra.mxu0 0.0
    %1367 = vmatpush.msra.mxu0 0.0
    %1368 = vmatpush.msra.mxu0 0.0
    %1369 = vmatpush.msra.mxu0 0.0
    %1370 = vmatpush.msra.mxu0 0.0
    %1371 = vmatpush.msra.mxu0 0.0
    %1372 = vmatpush.msra.mxu0 0.0
    %1373 = vmatpush.msra.mxu0 0.0
    %1374 = vmatpush.msra.mxu0 0.0
    %1375 = vmatpush.msra.mxu0 0.0
    %1376 = vmatpush.msra.mxu0 0.0
    %1377 = vmatpush.msra.mxu0 0.0
    %1378 = vmatpush.msra.mxu0 0.0
    %1379 = vmatpush.msra.mxu0 %v1242
    %1380 = vmatpush.msra.mxu0 %v1241
    %1381 = vmatmul.f32.gmra.mxu0 %v1361
    %v1382 = vpop.f32.mrf.mxu0
    %v1383 = vadd.f32 0.0, %v1382
    %1384 = vmatmul.f32.gmra.mxu0 %v1363
    %v1385 = vpop.f32.mrf.mxu0
    %v1386 = vadd.f32 0.0, %v1385
    %1387 = vdwg.mxu0
    %v1388 = vadd.f32 %v1352, %v1383
    %v1389 = vadd.f32 %v1355, %v1386
    %1390 = vset.pattern.permute.xlu0 48
    %1391 = vperm.xlu0 %1390, %v1243
    %v1392 = vpop.permute.xlu0 %1391
    %1394 = vset.pattern.permute.xlu0 48
    %1395 = vperm.xlu0 %1394, %v1244
    %v1396 = vpop.permute.xlu0 %1395
    %v1398 = vadd.f32 %v1388, %v1392
    %v1399 = vadd.f32 %v1389, %v1396
    %v1400 = vmax.f32 %v1398, 0.0
    %v1401 = vmax.f32 %v1399, 0.0
    %v1402 = vperm.slane %v1070, 0
    %v1403 = vmul.f32 %v761, %v1402
    %v1404 = vmul.f32 %v762, %v1402
    %v1405 = vadd.f32 %v1400, %v761
    %v1406 = vadd.f32 %v1401, %v762
    %v1407 = vadd.f32 %v1405, %v1403
    %v1408 = vadd.f32 %v1406, %v1404
    %v1409 = vmax.f32 %v1407, 0.0
    %v1410 = vmax.f32 %v1408, 0.0
    %1411 = vst.msk [vmem:[#allocation7] sm:$0xff] %vm206, %v1409
    %1412 = vst.msk [vmem:[#allocation7 + $0x8] sm:$0xff] %vm206, %v1410
    // Predicated region
    $region18: #{tpu_custom_call.1} parent=1 // pred_check
      _
    $region19: #{tpu_custom_call.1} parent=1 // pred_check_branch
      %1414 = sbr.rel (0) target = $region21
    $region20: #{tpu_custom_call.1} parent=1 // pred_region
      %1416 = vsyncadd [#allocation4], 0
      %s1417 = sshll.u32 [#allocation7], 4
      %s1418 = int_to_ptr.vmem [resolvable:$true] %s1417
      %s1419 = sshll.u32 %s2, 4
      %s1420 = int_to_ptr.hbm [resolvable:$true] %s1419
      %1425 = dma.vmem_to_hbm [thread:$0]  %s1418, 256, %s1420, [#allocation4], 128, 128, 8
    $region21: #{tpu_custom_call.1} parent=1 // pred_fallthru
      _
    // Predicated region
    $region22: #{tpu_custom_call.1} parent=1 // pred_check
      _
    $region23: #{tpu_custom_call.1} parent=1 // pred_check_branch
      %1427 = sbr.rel (0) target = $region25
    $region24: #{tpu_custom_call.1} parent=1 // pred_region
      %1429 = dma.done [#allocation4], 256
    $region25: #{tpu_custom_call.1} parent=1 // pred_fallthru
      _
    %1430 = vsyncpa [#allocation3], 1
    %1431 = vsyncpa [#allocation6], 1
    %1432 = vsyncpa [#allocation4], 1

</llo_original>
